<compile_context>
chip_gen: v7x
topology: tpu7x:2x2x1
jax: 0.10.0
libtpu: 0.0.40
codegen_flags: <defaults>
</compile_context>

<pallas_src>
import jax
import jax.numpy as jnp
import numpy as np
from jax.experimental import pallas as pl
from jax.experimental.pallas import tpu as pltpu

# ---------------- small, module-consistent hyperparameters ----------------
N = 4            # batch
BB = 2           # batch elements per grid step
E = 8            # num_electrodes
T = 128          # chunk_size
F1 = 4
D = 2
C2 = F1 * D      # F1 * D = 8
F2 = 8
K1 = 8           # kernel_1 (temporal conv, block1)
K2 = 4           # kernel_2 (depthwise temporal conv, block2)
LATENT = 16      # laten_size
EPS = 1e-3       # BatchNorm eps

PAD1 = K1 // 2
TP1 = T + 2 * PAD1               # 136: padded time width fed to the kernel
T1 = TP1 - K1 + 1                # 129: full conv1 width (reference only)
T2 = (T1 - 4) // 4 + 1           # 32: after AvgPool(1,4) stride 4
T1C = 4 * T2                     # 128: lane-aligned width actually consumed
PAD2 = K2 // 2
T3 = T2 + 2 * PAD2 - K2 + 1      # 33: full depthwise conv width (reference only)
T4 = (T3 - 8) // 8 + 1           # 4: after AvgPool(1,8) stride 8
T3C = 8 * T4                     # 32: lane-aligned width actually consumed
FEAT = F2 * T4                   # 32 == feature_dim()

# offsets inside the packed (8, 128) per-channel parameter slab
WF_OFF = 0                       # fused conv1+BN1+spatial+BN2 weight  (C2, E*K1)
W5_OFF = WF_OFF + E * K1         # 64: pointwise conv, BN3 scale folded (F2, C2)
BF_OFF = W5_OFF + C2             # 72: fused block1 bias                (C2, 1)
B3_OFF = BF_OFF + 1              # 73: BN3 shift                        (F2, 1)
W4_OFF = B3_OFF + 1              # 74: depthwise temporal conv          (C2, K2)
P8_W = 128


def _elu(v):
    return jnp.where(v > 0, v, jnp.exp(jnp.minimum(v, 0.0)) - 1.0)


def _pool_matrix(width, window):
    return (jnp.arange(width)[:, None] // window ==
            jnp.arange(width // window)[None, :]).astype(jnp.float32) / window


# ------------------------------- kernel -----------------------------------
def eegnet_kernel(x_ref, p8_ref, pool1_ref, p32_ref, out_ref):
    wf2 = p8_ref[:, WF_OFF:WF_OFF + E * K1]          # (C2, 64)
    w5f = p8_ref[:, W5_OFF:W5_OFF + C2]              # (F2, C2)
    bf = p8_ref[:, BF_OFF:BF_OFF + 1]                # (C2, 1)
    b3 = p8_ref[:, B3_OFF:B3_OFF + 1]                # (F2, 1)
    w4 = p8_ref[:, W4_OFF:W4_OFF + K2]               # (C2, K2)
    pool1 = pool1_ref[...]                           # (128, 32)
    pool2 = p32_ref[:, 0:T4]                         # (32, 4)
    whead_t = p32_ref[:, T4:T4 + 2 * LATENT]         # (32, 32)

    rows = []
    for b in range(BB):
        xb = x_ref[b]                                # (E, TP1)

        # ---- block1: one fused im2col matmul (conv1+BN1+spatial+BN2) ----
        # slab row k*E + e holds x[e, k : k + 128]
        slab = jnp.concatenate([xb[:, k:k + T1C] for k in range(K1)], axis=0)
        y2 = jnp.dot(wf2, slab, preferred_element_type=jnp.float32) + bf
        y2 = _elu(y2)                                # (C2, 128)
        y3 = jnp.dot(y2, pool1, preferred_element_type=jnp.float32)   # (C2, 32)

        # ---- block2: depthwise temporal conv, padding held in registers ----
        acc = jnp.zeros((C2, T3C), jnp.float32)
        for k in range(K2):
            d = k - PAD2
            if d == 0:
                sk = y3
            elif d > 0:
                sk = jnp.concatenate(
                    [y3[:, d:], jnp.zeros((C2, d), jnp.float32)], axis=1)
            else:
                sk = jnp.concatenate(
                    [jnp.zeros((C2, -d), jnp.float32), y3[:, :T2 + d]], axis=1)
            acc = acc + w4[:, k:k + 1] * sk

        # pointwise conv (BN3 scale folded) + BN3 shift + ELU + AvgPool(1,8)
        y5 = jnp.dot(w5f, acc, preferred_element_type=jnp.float32) + b3
        y5 = _elu(y5)                                # (F2, 32)
        y6 = jnp.dot(y5, pool2, preferred_element_type=jnp.float32)   # (F2, 4)

        # channel-major flatten (matches torch .flatten(start_dim=1))
        rows.append(jnp.concatenate([y6[c:c + 1, :] for c in range(F2)], axis=1))

    flat = jnp.concatenate(rows, axis=0)             # (BB, FEAT)
    # fused mu/logvar heads, lane-major output row per batch element
    out_ref[0] = jnp.dot(flat, whead_t, preferred_element_type=jnp.float32)


# ------------------------------- wrapper -----------------------------------
def eegnet_forward(x, params):
    (w1, s1, b1, w2full, s2, b2, w4, w5, s3, b3, wmu, wlv) = params
    n = x.shape[0]
    assert n % BB == 0

    # ---- fold conv1 + BN1 + grouped spatial conv + BN2 into one matmul ----
    w2g = w2full.reshape(C2, F1, E)
    wf = jnp.einsum('ofe,f,fk->oke', w2g, s1, w1).reshape(C2, K1 * E)
    bc = jnp.einsum('ofe,f->o', w2g, b1)
    wf2 = s2[:, None] * wf
    bf = s2 * bc + b2

    # ---- fold BN3 scale into the pointwise conv ----
    w5f = s3[:, None] * w5

    # ---- pooling-as-matmul matrices and fused latent head ----
    pool1 = _pool_matrix(T1C, 4)                     # (128, 32)
    pool2 = _pool_matrix(T3C, 8)                     # (32, 4)
    whead_t = jnp.concatenate([wmu, wlv], axis=0).T  # (FEAT, 2*LATENT)

    # ---- pack the small per-channel parameters into one (8, 128) slab ----
    p8 = jnp.zeros((C2, P8_W), jnp.float32)
    p8 = p8.at[:, WF_OFF:WF_OFF + E * K1].set(wf2)
    p8 = p8.at[:, W5_OFF:W5_OFF + C2].set(w5f)
    p8 = p8.at[:, BF_OFF:BF_OFF + 1].set(bf[:, None])
    p8 = p8.at[:, B3_OFF:B3_OFF + 1].set(b3[:, None])
    p8 = p8.at[:, W4_OFF:W4_OFF + K2].set(w4)
    p32 = jnp.concatenate([pool2, whead_t], axis=1)  # (32, 4 + 32)

    # ---- glue: NCHW (n,1,E,T) -> (n,E,TP1) with symmetric time padding ----
    xp = jnp.pad(x[:, 0], ((0, 0), (0, 0), (PAD1, PAD1)))

    out = pl.pallas_call(
        eegnet_kernel,
        out_shape=jax.ShapeDtypeStruct((n // BB, BB, 2 * LATENT), jnp.float32),
        grid_spec=pltpu.PrefetchScalarGridSpec(
            num_scalar_prefetch=0,
            grid=(n // BB,),
            in_specs=[
                pl.BlockSpec((BB, E, TP1), lambda i: (i, 0, 0)),
                pl.BlockSpec((C2, P8_W), lambda i: (0, 0)),
                pl.BlockSpec((T1C, T2), lambda i: (0, 0)),
                pl.BlockSpec((T3C, T4 + 2 * LATENT), lambda i: (0, 0)),
            ],
            out_specs=pl.BlockSpec((1, BB, 2 * LATENT), lambda i: (i, 0, 0)),
        ),
        compiler_params=pltpu.CompilerParams(
            dimension_semantics=("parallel",)),
    )(xp, p8, pool1, p32)

    out = out.reshape(n, 2 * LATENT)
    return out[:, :LATENT], out[:, LATENT:]


# -------------------------- deterministic params ---------------------------
def init_params(key):
    ks = jax.random.split(key, 18)

    def bn_fold(g, be, rm, rv):
        s = g / jnp.sqrt(rv + EPS)
        return s, be - rm * s

    # block1: temporal conv (1 -> F1), kernel (1, K1), no bias
    w1 = jax.random.normal(ks[0], (F1, K1), jnp.float32) * 0.2
    s1, b1 = bn_fold(1.0 + 0.1 * jax.random.normal(ks[1], (F1,)),
                     0.1 * jax.random.normal(ks[2], (F1,)),
                     0.05 * jax.random.normal(ks[3], (F1,)),
                     0.5 + jax.random.uniform(ks[4], (F1,)))

    # Conv2dWithConstraint (F1 -> F1*D), kernel (E, 1), groups=F1, max_norm=1
    w_sp = jax.random.normal(ks[5], (C2, E), jnp.float32) * 0.3
    norms = jnp.sqrt(jnp.sum(w_sp ** 2, axis=1, keepdims=True))
    w_sp = w_sp * jnp.minimum(1.0, 1.0 / jnp.maximum(norms, 1e-12))
    w2full = jnp.zeros((C2, F1 * E), jnp.float32)
    for o in range(C2):
        g = o // D
        w2full = w2full.at[o, g * E:(g + 1) * E].set(w_sp[o])

    s2, b2 = bn_fold(1.0 + 0.1 * jax.random.normal(ks[6], (C2,)),
                     0.1 * jax.random.normal(ks[7], (C2,)),
                     0.05 * jax.random.normal(ks[8], (C2,)),
                     0.5 + jax.random.uniform(ks[9], (C2,)))

    # block2: depthwise temporal conv + pointwise conv + BN3
    w4 = jax.random.normal(ks[10], (C2, K2), jnp.float32) * 0.3
    w5 = jax.random.normal(ks[11], (F2, C2), jnp.float32) * 0.3
    s3, b3 = bn_fold(1.0 + 0.1 * jax.random.normal(ks[12], (F2,)),
                     0.1 * jax.random.normal(ks[13], (F2,)),
                     0.05 * jax.random.normal(ks[14], (F2,)),
                     0.5 + jax.random.uniform(ks[15], (F2,)))

    # latent heads (Linear, no bias), PyTorch weight layout (LATENT, FEAT)
    wmu = jax.random.normal(ks[16], (LATENT, FEAT), jnp.float32) * 0.2
    wlv = jax.random.normal(ks[17], (LATENT, FEAT), jnp.float32) * 0.2

    return (w1, s1, b1, w2full, s2, b2, w4, w5, s3, b3, wmu, wlv)


# ---------------------- pure-JAX reference (for checking) -------------------
def reference_forward(x, params):
    (w1, s1, b1, w2full, s2, b2, w4, w5, s3, b3, wmu, wlv) = params
    n = x.shape[0]
    xp = jnp.pad(x[:, 0], ((0, 0), (0, 0), (PAD1, PAD1)))
    cols = jnp.stack([xp[:, :, k:k + T1] for k in range(K1)], axis=-1)   # (N,E,T1,K1)
    y1 = jnp.einsum('netk,fk->nfet', cols, w1)
    y1 = y1 * s1[None, :, None, None] + b1[None, :, None, None]
    y1f = y1.reshape(n, F1 * E, T1)
    y2 = jnp.einsum('oc,nct->not', w2full, y1f)
    y2 = y2 * s2[None, :, None] + b2[None, :, None]
    y2 = _elu(y2)
    pool1 = _pool_matrix(T1C, 4)
    y3 = jnp.einsum('nct,tp->ncp', y2[:, :, :T1C], pool1)
    y3p = jnp.pad(y3, ((0, 0), (0, 0), (PAD2, PAD2)))
    y4 = sum(w4[None, :, k:k + 1] * y3p[:, :, k:k + T3] for k in range(K2))
    y5 = jnp.einsum('fc,nct->nft', w5, y4)
    y5 = y5 * s3[None, :, None] + b3[None, :, None]
    y5 = _elu(y5)
    pool2 = _pool_matrix(T3C, 8)
    y6 = jnp.einsum('nft,tp->nfp', y5[:, :, :T3C], pool2)
    flat = y6.reshape(n, FEAT)
    return flat @ wmu.T, flat @ wlv.T


# ----------------------------------- main -----------------------------------
if __name__ == "__main__":
    key = jax.random.PRNGKey(0)
    kx, kp = jax.random.split(key)
    x = jax.random.normal(kx, (N, 1, E, T), jnp.float32)   # NCHW like PyTorch
    params = init_params(kp)

    mu, lv = jax.jit(eegnet_forward)(x, params)
    jax.block_until_ready((mu, lv))

    mu_ref, lv_ref = reference_forward(x, params)
    assert mu.shape == (N, LATENT) and lv.shape == (N, LATENT)
    if not (np.allclose(np.asarray(mu), np.asarray(mu_ref), rtol=2e-3, atol=2e-3) and
            np.allclose(np.asarray(lv), np.asarray(lv_ref), rtol=2e-3, atol=2e-3)):
        raise SystemExit("mismatch vs pure-JAX reference")
    print("KERNEL_OK")
</pallas_src>

<mosaic_0001>
module attributes {stable_mosaic.version = 11 : i64} {
  func.func @eegnet_kernel(%arg0: i32, %arg1: memref<2x8x136xf32, #tpu.memory_space<vmem>>, %arg2: memref<8x128xf32, #tpu.memory_space<vmem>>, %arg3: memref<128x32xf32, #tpu.memory_space<vmem>>, %arg4: memref<32x36xf32, #tpu.memory_space<vmem>>, %arg5: memref<1x2x32xf32, #tpu.memory_space<vmem>>) attributes {dimension_semantics = [#tpu.dimension_semantics<parallel>], iteration_bounds = array<i64: 2>, scalar_prefetch = 0 : i64, scratch_operands = 0 : i64, tpu.core_type = #tpu.core_type<tc>, window_params = [{transform_indices = @transform_0, window_bounds = array<i64: 2, 8, 136>}, {pipeline_mode = #tpu.pipeline_mode<synchronous>, transform_indices = @transform_1, window_bounds = array<i64: 8, 128>}, {pipeline_mode = #tpu.pipeline_mode<synchronous>, transform_indices = @transform_2, window_bounds = array<i64: 128, 32>}, {pipeline_mode = #tpu.pipeline_mode<synchronous>, transform_indices = @transform_3, window_bounds = array<i64: 32, 36>}, {transform_indices = @transform_4, window_bounds = array<i64: 1, 2, 32>}]} {
    %c0 = arith.constant 0 : index
    %c0_0 = arith.constant 0 : index
    %0 = vector.load %arg2[%c0, %c0_0] : memref<8x128xf32, #tpu.memory_space<vmem>>, vector<8x64xf32>
    %c0_1 = arith.constant 0 : index
    %c64 = arith.constant 64 : index
    %1 = vector.load %arg2[%c0_1, %c64] : memref<8x128xf32, #tpu.memory_space<vmem>>, vector<8x8xf32>
    %c0_2 = arith.constant 0 : index
    %c72 = arith.constant 72 : index
    %2 = vector.load %arg2[%c0_2, %c72] : memref<8x128xf32, #tpu.memory_space<vmem>>, vector<8x1xf32>
    %c0_3 = arith.constant 0 : index
    %c73 = arith.constant 73 : index
    %3 = vector.load %arg2[%c0_3, %c73] : memref<8x128xf32, #tpu.memory_space<vmem>>, vector<8x1xf32>
    %c0_4 = arith.constant 0 : index
    %c74 = arith.constant 74 : index
    %4 = vector.load %arg2[%c0_4, %c74] : memref<8x128xf32, #tpu.memory_space<vmem>>, vector<8x4xf32>
    %c0_5 = arith.constant 0 : index
    %c0_6 = arith.constant 0 : index
    %5 = vector.load %arg3[%c0_5, %c0_6] : memref<128x32xf32, #tpu.memory_space<vmem>>, vector<128x32xf32>
    %c0_7 = arith.constant 0 : index
    %c0_8 = arith.constant 0 : index
    %6 = vector.load %arg4[%c0_7, %c0_8] : memref<32x36xf32, #tpu.memory_space<vmem>>, vector<32x4xf32>
    %c0_9 = arith.constant 0 : index
    %c4 = arith.constant 4 : index
    %7 = vector.load %arg4[%c0_9, %c4] : memref<32x36xf32, #tpu.memory_space<vmem>>, vector<32x32xf32>
    %c0_10 = arith.constant 0 : index
    %c0_11 = arith.constant 0 : index
    %c0_12 = arith.constant 0 : index
    %8 = vector.load %arg1[%c0_10, %c0_11, %c0_12] : memref<2x8x136xf32, #tpu.memory_space<vmem>>, vector<1x8x136xf32>
    %9 = vector.shape_cast %8 : vector<1x8x136xf32> to vector<8x136xf32>
    %10 = vector.extract_strided_slice %9 {offsets = [0, 0], sizes = [8, 128], strides = [1, 1]} : vector<8x136xf32> to vector<8x128xf32>
    %11 = vector.extract_strided_slice %9 {offsets = [0, 1], sizes = [8, 128], strides = [1, 1]} : vector<8x136xf32> to vector<8x128xf32>
    %12 = vector.extract_strided_slice %9 {offsets = [0, 2], sizes = [8, 128], strides = [1, 1]} : vector<8x136xf32> to vector<8x128xf32>
    %13 = vector.extract_strided_slice %9 {offsets = [0, 3], sizes = [8, 128], strides = [1, 1]} : vector<8x136xf32> to vector<8x128xf32>
    %14 = vector.extract_strided_slice %9 {offsets = [0, 4], sizes = [8, 128], strides = [1, 1]} : vector<8x136xf32> to vector<8x128xf32>
    %15 = vector.extract_strided_slice %9 {offsets = [0, 5], sizes = [8, 128], strides = [1, 1]} : vector<8x136xf32> to vector<8x128xf32>
    %16 = vector.extract_strided_slice %9 {offsets = [0, 6], sizes = [8, 128], strides = [1, 1]} : vector<8x136xf32> to vector<8x128xf32>
    %17 = vector.extract_strided_slice %9 {offsets = [0, 7], sizes = [8, 128], strides = [1, 1]} : vector<8x136xf32> to vector<8x128xf32>
    %18 = tpu.concatenate %10, %11, %12, %13, %14, %15, %16, %17 in 0 : vector<8x128xf32>, vector<8x128xf32>, vector<8x128xf32>, vector<8x128xf32>, vector<8x128xf32>, vector<8x128xf32>, vector<8x128xf32>, vector<8x128xf32> -> vector<64x128xf32>
    %cst = arith.constant dense<0.000000e+00> : vector<8x128xf32>
    %19 = tpu.matmul %0, %18, %cst {dimension_numbers = #tpu.dot_dimension_numbers<[1], [0], [0], [1], [0, 0, 1, 1], [], []>} : vector<8x64xf32>, vector<64x128xf32>, vector<8x128xf32> -> vector<8x128xf32>
    %20 = vector.broadcast %2 : vector<8x1xf32> to vector<8x128xf32>
    %21 = arith.addf %19, %20 : vector<8x128xf32>
    %cst_13 = arith.constant 0.000000e+00 : f32
    %22 = vector.broadcast %cst_13 : f32 to vector<8x128xf32>
    %23 = arith.cmpf ogt, %21, %22 : vector<8x128xf32>
    %cst_14 = arith.constant 0.000000e+00 : f32
    %24 = vector.broadcast %cst_14 : f32 to vector<8x128xf32>
    %25 = arith.minimumf %21, %24 : vector<8x128xf32>
    %26 = math.exp %25 : vector<8x128xf32>
    %cst_15 = arith.constant 1.000000e+00 : f32
    %27 = vector.broadcast %cst_15 : f32 to vector<8x128xf32>
    %28 = arith.subf %26, %27 : vector<8x128xf32>
    %29 = arith.select %23, %21, %28 : vector<8x128xi1>, vector<8x128xf32>
    %cst_16 = arith.constant dense<0.000000e+00> : vector<8x32xf32>
    %30 = tpu.matmul %29, %5, %cst_16 {dimension_numbers = #tpu.dot_dimension_numbers<[1], [0], [0], [1], [0, 0, 1, 1], [], []>} : vector<8x128xf32>, vector<128x32xf32>, vector<8x32xf32> -> vector<8x32xf32>
    %cst_17 = arith.constant 0.000000e+00 : f32
    %31 = vector.broadcast %cst_17 : f32 to vector<8x32xf32>
    %cst_18 = arith.constant 0.000000e+00 : f32
    %32 = vector.broadcast %cst_18 : f32 to vector<8x2xf32>
    %33 = vector.extract_strided_slice %30 {offsets = [0, 0], sizes = [8, 30], strides = [1, 1]} : vector<8x32xf32> to vector<8x30xf32>
    %34 = tpu.concatenate %32, %33 in 1 : vector<8x2xf32>, vector<8x30xf32> -> vector<8x32xf32>
    %35 = vector.extract_strided_slice %4 {offsets = [0, 0], sizes = [8, 1], strides = [1, 1]} : vector<8x4xf32> to vector<8x1xf32>
    %36 = vector.broadcast %35 : vector<8x1xf32> to vector<8x32xf32>
    %37 = arith.mulf %36, %34 : vector<8x32xf32>
    %38 = arith.addf %31, %37 : vector<8x32xf32>
    %cst_19 = arith.constant 0.000000e+00 : f32
    %39 = vector.broadcast %cst_19 : f32 to vector<8x1xf32>
    %40 = vector.extract_strided_slice %30 {offsets = [0, 0], sizes = [8, 31], strides = [1, 1]} : vector<8x32xf32> to vector<8x31xf32>
    %41 = tpu.concatenate %39, %40 in 1 : vector<8x1xf32>, vector<8x31xf32> -> vector<8x32xf32>
    %42 = vector.extract_strided_slice %4 {offsets = [0, 1], sizes = [8, 1], strides = [1, 1]} : vector<8x4xf32> to vector<8x1xf32>
    %43 = vector.broadcast %42 : vector<8x1xf32> to vector<8x32xf32>
    %44 = arith.mulf %43, %41 : vector<8x32xf32>
    %45 = arith.addf %38, %44 : vector<8x32xf32>
    %46 = vector.extract_strided_slice %4 {offsets = [0, 2], sizes = [8, 1], strides = [1, 1]} : vector<8x4xf32> to vector<8x1xf32>
    %47 = vector.broadcast %46 : vector<8x1xf32> to vector<8x32xf32>
    %48 = arith.mulf %47, %30 : vector<8x32xf32>
    %49 = arith.addf %45, %48 : vector<8x32xf32>
    %50 = vector.extract_strided_slice %30 {offsets = [0, 1], sizes = [8, 31], strides = [1, 1]} : vector<8x32xf32> to vector<8x31xf32>
    %cst_20 = arith.constant 0.000000e+00 : f32
    %51 = vector.broadcast %cst_20 : f32 to vector<8x1xf32>
    %52 = tpu.concatenate %50, %51 in 1 : vector<8x31xf32>, vector<8x1xf32> -> vector<8x32xf32>
    %53 = vector.extract_strided_slice %4 {offsets = [0, 3], sizes = [8, 1], strides = [1, 1]} : vector<8x4xf32> to vector<8x1xf32>
    %54 = vector.broadcast %53 : vector<8x1xf32> to vector<8x32xf32>
    %55 = arith.mulf %54, %52 : vector<8x32xf32>
    %56 = arith.addf %49, %55 : vector<8x32xf32>
    %cst_21 = arith.constant dense<0.000000e+00> : vector<8x32xf32>
    %57 = tpu.matmul %1, %56, %cst_21 {dimension_numbers = #tpu.dot_dimension_numbers<[1], [0], [0], [1], [0, 0, 1, 1], [], []>} : vector<8x8xf32>, vector<8x32xf32>, vector<8x32xf32> -> vector<8x32xf32>
    %58 = vector.broadcast %3 : vector<8x1xf32> to vector<8x32xf32>
    %59 = arith.addf %57, %58 : vector<8x32xf32>
    %cst_22 = arith.constant 0.000000e+00 : f32
    %60 = vector.broadcast %cst_22 : f32 to vector<8x32xf32>
    %61 = arith.cmpf ogt, %59, %60 : vector<8x32xf32>
    %cst_23 = arith.constant 0.000000e+00 : f32
    %62 = vector.broadcast %cst_23 : f32 to vector<8x32xf32>
    %63 = arith.minimumf %59, %62 : vector<8x32xf32>
    %64 = math.exp %63 : vector<8x32xf32>
    %cst_24 = arith.constant 1.000000e+00 : f32
    %65 = vector.broadcast %cst_24 : f32 to vector<8x32xf32>
    %66 = arith.subf %64, %65 : vector<8x32xf32>
    %67 = arith.select %61, %59, %66 : vector<8x32xi1>, vector<8x32xf32>
    %cst_25 = arith.constant dense<0.000000e+00> : vector<8x4xf32>
    %68 = tpu.matmul %67, %6, %cst_25 {dimension_numbers = #tpu.dot_dimension_numbers<[1], [0], [0], [1], [0, 0, 1, 1], [], []>} : vector<8x32xf32>, vector<32x4xf32>, vector<8x4xf32> -> vector<8x4xf32>
    %69 = vector.extract_strided_slice %68 {offsets = [0, 0], sizes = [1, 4], strides = [1, 1]} : vector<8x4xf32> to vector<1x4xf32>
    %70 = vector.extract_strided_slice %68 {offsets = [1, 0], sizes = [1, 4], strides = [1, 1]} : vector<8x4xf32> to vector<1x4xf32>
    %71 = vector.extract_strided_slice %68 {offsets = [2, 0], sizes = [1, 4], strides = [1, 1]} : vector<8x4xf32> to vector<1x4xf32>
    %72 = vector.extract_strided_slice %68 {offsets = [3, 0], sizes = [1, 4], strides = [1, 1]} : vector<8x4xf32> to vector<1x4xf32>
    %73 = vector.extract_strided_slice %68 {offsets = [4, 0], sizes = [1, 4], strides = [1, 1]} : vector<8x4xf32> to vector<1x4xf32>
    %74 = vector.extract_strided_slice %68 {offsets = [5, 0], sizes = [1, 4], strides = [1, 1]} : vector<8x4xf32> to vector<1x4xf32>
    %75 = vector.extract_strided_slice %68 {offsets = [6, 0], sizes = [1, 4], strides = [1, 1]} : vector<8x4xf32> to vector<1x4xf32>
    %76 = vector.extract_strided_slice %68 {offsets = [7, 0], sizes = [1, 4], strides = [1, 1]} : vector<8x4xf32> to vector<1x4xf32>
    %77 = tpu.concatenate %69, %70, %71, %72, %73, %74, %75, %76 in 1 : vector<1x4xf32>, vector<1x4xf32>, vector<1x4xf32>, vector<1x4xf32>, vector<1x4xf32>, vector<1x4xf32>, vector<1x4xf32>, vector<1x4xf32> -> vector<1x32xf32>
    %c1 = arith.constant 1 : index
    %c0_26 = arith.constant 0 : index
    %c0_27 = arith.constant 0 : index
    %78 = vector.load %arg1[%c1, %c0_26, %c0_27] : memref<2x8x136xf32, #tpu.memory_space<vmem>>, vector<1x8x136xf32>
    %79 = vector.shape_cast %78 : vector<1x8x136xf32> to vector<8x136xf32>
    %80 = vector.extract_strided_slice %79 {offsets = [0, 0], sizes = [8, 128], strides = [1, 1]} : vector<8x136xf32> to vector<8x128xf32>
    %81 = vector.extract_strided_slice %79 {offsets = [0, 1], sizes = [8, 128], strides = [1, 1]} : vector<8x136xf32> to vector<8x128xf32>
    %82 = vector.extract_strided_slice %79 {offsets = [0, 2], sizes = [8, 128], strides = [1, 1]} : vector<8x136xf32> to vector<8x128xf32>
    %83 = vector.extract_strided_slice %79 {offsets = [0, 3], sizes = [8, 128], strides = [1, 1]} : vector<8x136xf32> to vector<8x128xf32>
    %84 = vector.extract_strided_slice %79 {offsets = [0, 4], sizes = [8, 128], strides = [1, 1]} : vector<8x136xf32> to vector<8x128xf32>
    %85 = vector.extract_strided_slice %79 {offsets = [0, 5], sizes = [8, 128], strides = [1, 1]} : vector<8x136xf32> to vector<8x128xf32>
    %86 = vector.extract_strided_slice %79 {offsets = [0, 6], sizes = [8, 128], strides = [1, 1]} : vector<8x136xf32> to vector<8x128xf32>
    %87 = vector.extract_strided_slice %79 {offsets = [0, 7], sizes = [8, 128], strides = [1, 1]} : vector<8x136xf32> to vector<8x128xf32>
    %88 = tpu.concatenate %80, %81, %82, %83, %84, %85, %86, %87 in 0 : vector<8x128xf32>, vector<8x128xf32>, vector<8x128xf32>, vector<8x128xf32>, vector<8x128xf32>, vector<8x128xf32>, vector<8x128xf32>, vector<8x128xf32> -> vector<64x128xf32>
    %cst_28 = arith.constant dense<0.000000e+00> : vector<8x128xf32>
    %89 = tpu.matmul %0, %88, %cst_28 {dimension_numbers = #tpu.dot_dimension_numbers<[1], [0], [0], [1], [0, 0, 1, 1], [], []>} : vector<8x64xf32>, vector<64x128xf32>, vector<8x128xf32> -> vector<8x128xf32>
    %90 = vector.broadcast %2 : vector<8x1xf32> to vector<8x128xf32>
    %91 = arith.addf %89, %90 : vector<8x128xf32>
    %cst_29 = arith.constant 0.000000e+00 : f32
    %92 = vector.broadcast %cst_29 : f32 to vector<8x128xf32>
    %93 = arith.cmpf ogt, %91, %92 : vector<8x128xf32>
    %cst_30 = arith.constant 0.000000e+00 : f32
    %94 = vector.broadcast %cst_30 : f32 to vector<8x128xf32>
    %95 = arith.minimumf %91, %94 : vector<8x128xf32>
    %96 = math.exp %95 : vector<8x128xf32>
    %cst_31 = arith.constant 1.000000e+00 : f32
    %97 = vector.broadcast %cst_31 : f32 to vector<8x128xf32>
    %98 = arith.subf %96, %97 : vector<8x128xf32>
    %99 = arith.select %93, %91, %98 : vector<8x128xi1>, vector<8x128xf32>
    %cst_32 = arith.constant dense<0.000000e+00> : vector<8x32xf32>
    %100 = tpu.matmul %99, %5, %cst_32 {dimension_numbers = #tpu.dot_dimension_numbers<[1], [0], [0], [1], [0, 0, 1, 1], [], []>} : vector<8x128xf32>, vector<128x32xf32>, vector<8x32xf32> -> vector<8x32xf32>
    %cst_33 = arith.constant 0.000000e+00 : f32
    %101 = vector.broadcast %cst_33 : f32 to vector<8x32xf32>
    %cst_34 = arith.constant 0.000000e+00 : f32
    %102 = vector.broadcast %cst_34 : f32 to vector<8x2xf32>
    %103 = vector.extract_strided_slice %100 {offsets = [0, 0], sizes = [8, 30], strides = [1, 1]} : vector<8x32xf32> to vector<8x30xf32>
    %104 = tpu.concatenate %102, %103 in 1 : vector<8x2xf32>, vector<8x30xf32> -> vector<8x32xf32>
    %105 = vector.extract_strided_slice %4 {offsets = [0, 0], sizes = [8, 1], strides = [1, 1]} : vector<8x4xf32> to vector<8x1xf32>
    %106 = vector.broadcast %105 : vector<8x1xf32> to vector<8x32xf32>
    %107 = arith.mulf %106, %104 : vector<8x32xf32>
    %108 = arith.addf %101, %107 : vector<8x32xf32>
    %cst_35 = arith.constant 0.000000e+00 : f32
    %109 = vector.broadcast %cst_35 : f32 to vector<8x1xf32>
    %110 = vector.extract_strided_slice %100 {offsets = [0, 0], sizes = [8, 31], strides = [1, 1]} : vector<8x32xf32> to vector<8x31xf32>
    %111 = tpu.concatenate %109, %110 in 1 : vector<8x1xf32>, vector<8x31xf32> -> vector<8x32xf32>
    %112 = vector.extract_strided_slice %4 {offsets = [0, 1], sizes = [8, 1], strides = [1, 1]} : vector<8x4xf32> to vector<8x1xf32>
    %113 = vector.broadcast %112 : vector<8x1xf32> to vector<8x32xf32>
    %114 = arith.mulf %113, %111 : vector<8x32xf32>
    %115 = arith.addf %108, %114 : vector<8x32xf32>
    %116 = vector.extract_strided_slice %4 {offsets = [0, 2], sizes = [8, 1], strides = [1, 1]} : vector<8x4xf32> to vector<8x1xf32>
    %117 = vector.broadcast %116 : vector<8x1xf32> to vector<8x32xf32>
    %118 = arith.mulf %117, %100 : vector<8x32xf32>
    %119 = arith.addf %115, %118 : vector<8x32xf32>
    %120 = vector.extract_strided_slice %100 {offsets = [0, 1], sizes = [8, 31], strides = [1, 1]} : vector<8x32xf32> to vector<8x31xf32>
    %cst_36 = arith.constant 0.000000e+00 : f32
    %121 = vector.broadcast %cst_36 : f32 to vector<8x1xf32>
    %122 = tpu.concatenate %120, %121 in 1 : vector<8x31xf32>, vector<8x1xf32> -> vector<8x32xf32>
    %123 = vector.extract_strided_slice %4 {offsets = [0, 3], sizes = [8, 1], strides = [1, 1]} : vector<8x4xf32> to vector<8x1xf32>
    %124 = vector.broadcast %123 : vector<8x1xf32> to vector<8x32xf32>
    %125 = arith.mulf %124, %122 : vector<8x32xf32>
    %126 = arith.addf %119, %125 : vector<8x32xf32>
    %cst_37 = arith.constant dense<0.000000e+00> : vector<8x32xf32>
    %127 = tpu.matmul %1, %126, %cst_37 {dimension_numbers = #tpu.dot_dimension_numbers<[1], [0], [0], [1], [0, 0, 1, 1], [], []>} : vector<8x8xf32>, vector<8x32xf32>, vector<8x32xf32> -> vector<8x32xf32>
    %128 = vector.broadcast %3 : vector<8x1xf32> to vector<8x32xf32>
    %129 = arith.addf %127, %128 : vector<8x32xf32>
    %cst_38 = arith.constant 0.000000e+00 : f32
    %130 = vector.broadcast %cst_38 : f32 to vector<8x32xf32>
    %131 = arith.cmpf ogt, %129, %130 : vector<8x32xf32>
    %cst_39 = arith.constant 0.000000e+00 : f32
    %132 = vector.broadcast %cst_39 : f32 to vector<8x32xf32>
    %133 = arith.minimumf %129, %132 : vector<8x32xf32>
    %134 = math.exp %133 : vector<8x32xf32>
    %cst_40 = arith.constant 1.000000e+00 : f32
    %135 = vector.broadcast %cst_40 : f32 to vector<8x32xf32>
    %136 = arith.subf %134, %135 : vector<8x32xf32>
    %137 = arith.select %131, %129, %136 : vector<8x32xi1>, vector<8x32xf32>
    %cst_41 = arith.constant dense<0.000000e+00> : vector<8x4xf32>
    %138 = tpu.matmul %137, %6, %cst_41 {dimension_numbers = #tpu.dot_dimension_numbers<[1], [0], [0], [1], [0, 0, 1, 1], [], []>} : vector<8x32xf32>, vector<32x4xf32>, vector<8x4xf32> -> vector<8x4xf32>
    %139 = vector.extract_strided_slice %138 {offsets = [0, 0], sizes = [1, 4], strides = [1, 1]} : vector<8x4xf32> to vector<1x4xf32>
    %140 = vector.extract_strided_slice %138 {offsets = [1, 0], sizes = [1, 4], strides = [1, 1]} : vector<8x4xf32> to vector<1x4xf32>
    %141 = vector.extract_strided_slice %138 {offsets = [2, 0], sizes = [1, 4], strides = [1, 1]} : vector<8x4xf32> to vector<1x4xf32>
    %142 = vector.extract_strided_slice %138 {offsets = [3, 0], sizes = [1, 4], strides = [1, 1]} : vector<8x4xf32> to vector<1x4xf32>
    %143 = vector.extract_strided_slice %138 {offsets = [4, 0], sizes = [1, 4], strides = [1, 1]} : vector<8x4xf32> to vector<1x4xf32>
    %144 = vector.extract_strided_slice %138 {offsets = [5, 0], sizes = [1, 4], strides = [1, 1]} : vector<8x4xf32> to vector<1x4xf32>
    %145 = vector.extract_strided_slice %138 {offsets = [6, 0], sizes = [1, 4], strides = [1, 1]} : vector<8x4xf32> to vector<1x4xf32>
    %146 = vector.extract_strided_slice %138 {offsets = [7, 0], sizes = [1, 4], strides = [1, 1]} : vector<8x4xf32> to vector<1x4xf32>
    %147 = tpu.concatenate %139, %140, %141, %142, %143, %144, %145, %146 in 1 : vector<1x4xf32>, vector<1x4xf32>, vector<1x4xf32>, vector<1x4xf32>, vector<1x4xf32>, vector<1x4xf32>, vector<1x4xf32>, vector<1x4xf32> -> vector<1x32xf32>
    %148 = tpu.concatenate %77, %147 in 0 : vector<1x32xf32>, vector<1x32xf32> -> vector<2x32xf32>
    %cst_42 = arith.constant dense<0.000000e+00> : vector<2x32xf32>
    %149 = tpu.matmul %148, %7, %cst_42 {dimension_numbers = #tpu.dot_dimension_numbers<[1], [0], [0], [1], [0, 0, 1, 1], [], []>} : vector<2x32xf32>, vector<32x32xf32>, vector<2x32xf32> -> vector<2x32xf32>
    %c0_43 = arith.constant 0 : index
    %c0_44 = arith.constant 0 : index
    %c0_45 = arith.constant 0 : index
    %150 = vector.load %arg5[%c0_43, %c0_44, %c0_45] : memref<1x2x32xf32, #tpu.memory_space<vmem>>, vector<1x2x32xf32>
    %151 = vector.shape_cast %150 : vector<1x2x32xf32> to vector<2x32xf32>
    %152 = vector.shape_cast %149 : vector<2x32xf32> to vector<1x2x32xf32>
    tpu.vector_store %arg5[%c0_43, %c0_44, %c0_45], %152 {strides = array<i32>} : memref<1x2x32xf32, #tpu.memory_space<vmem>>, vector<1x2x32xf32>,
    return
  }
  func.func @transform_0(%arg0: i32) -> (i32, i32, i32) {
    %c0_i32 = arith.constant 0 : i32
    %c0_i32_0 = arith.constant 0 : i32
    %c0_i32_1 = arith.constant 0 : i32
    return %arg0, %c0_i32, %c0_i32_0 : i32, i32, i32
  }
  func.func @transform_1(%arg0: i32) -> (i32, i32) {
    %c0_i32 = arith.constant 0 : i32
    %c0_i32_0 = arith.constant 0 : i32
    %c0_i32_1 = arith.constant 0 : i32
    return %c0_i32, %c0_i32_0 : i32, i32
  }
  func.func @transform_2(%arg0: i32) -> (i32, i32) {
    %c0_i32 = arith.constant 0 : i32
    %c0_i32_0 = arith.constant 0 : i32
    %c0_i32_1 = arith.constant 0 : i32
    return %c0_i32, %c0_i32_0 : i32, i32
  }
  func.func @transform_3(%arg0: i32) -> (i32, i32) {
    %c0_i32 = arith.constant 0 : i32
    %c0_i32_0 = arith.constant 0 : i32
    %c0_i32_1 = arith.constant 0 : i32
    return %c0_i32, %c0_i32_0 : i32, i32
  }
  func.func @transform_4(%arg0: i32) -> (i32, i32, i32) {
    %c0_i32 = arith.constant 0 : i32
    %c0_i32_0 = arith.constant 0 : i32
    %c0_i32_1 = arith.constant 0 : i32
    return %arg0, %c0_i32, %c0_i32_0 : i32, i32, i32
  }
}

</mosaic_0001>

<llo_original>
// kernel: eegnet_forward.1
$region0: #{eegnet_forward.1}
  #allocation0 [shape = 'u32[]', space=smem, size = 0x4, offset = 0x4, fixed_abs, tag = 'smem constant byte address 0x4 - core index']
  #allocation1 [shape = 'u32[144,128]{1,0:T(1,128)}', space=vmem, size = 0x12000, scoped, tag = 'internal scratch']
  %s0 = inlined_call_operand.vmem [shape: f32[4,8,136], index: 0, kind: input, shape index: {}]
  %s1 = inlined_call_operand.vmem [shape: f32[8,128], index: 1, kind: input, shape index: {}]
  %s2 = inlined_call_operand.vmem [shape: f32[128,32], index: 2, kind: input, shape index: {}]
  %s3 = inlined_call_operand.vmem [shape: f32[32,36], index: 3, kind: input, shape index: {}]
  %s4 = inlined_call_operand.vmem [shape: f32[2,2,32], index: 4, kind: output, shape index: {}]
  %s5 = sld [smem:[#allocation0]]
  $region49: #{eegnet_forward.1} parent=0
    _
  %s7 = ssub.s32 1, %s5
  %s8 = scalar_select 0, %s7, %s5
  loop: start=0, step=1, limit=4
  $region2: #{eegnet_forward.1} parent=0 // loop_pre_header
    _
  $region3: #{eegnet_forward.1} parent=0 // loop_header
    %s10 = sphi 0, %s14
    %p11 = scmp.ge.s32.totalorder %s10, 4
    %s20 = sphi 0, %s22
    %s23 = sphi 0, %s20
    %s24 = sphi 0, %s23
    %s40 = sphi 0, %s24
    %s44 = sphi 0, %s44
    %s46 = sphi 0, %s44
    %s47 = sphi 0, %s46
    %s61 = sphi 0, %s47
    %s65 = sphi 0, %s65
    %s67 = sphi 0, %s65
    %s68 = sphi 0, %s67
    %s82 = sphi 0, %s68
    %s86 = sphi 0, %s86
    %s88 = sphi 0, %s86
    %s89 = sphi 0, %s88
    %s103 = sphi 0, %s89
    %s109 = sphi 0, %s111
    %s112 = sphi 0, %s109
    %s113 = sphi 0, %s112
    %s129 = sphi 0, %s113
  $region4: #{eegnet_forward.1} parent=0 // loop_header_branch
    %13 = sbr.rel (%p11) target = $region8
  $region5: #{eegnet_forward.1} parent=0 // loop_body
    %s15 = ssub.s32 %s10, 1
    %s16 = ssub.s32 %s10, 2
    %s17 = sadd.s32 %s10, 1
    %s18 = ssub.s32 %s10, %s17
    %p19 = scmp.eq.s32.totalorder %s18, 0
    %s21 = sadd.s32 %s20, 1
    %s22 = scalar_select %p19, %s20, %s21
    %p25 = pneg %p19
    %p26 = scmp.eq.s32.totalorder %s10, 1
    %p27 = por %p25, %p26
    %p28 = scmp.ne.s32.totalorder %s20, %s23
    %p29 = scmp.eq.s32.totalorder %s10, 0
    %p30 = por %p28, %p29
    %p31 = scmp.ne.s32.totalorder %s20, %s23
    %p32 = scmp.eq.s32.totalorder %s15, 1
    %p33 = por %p31, %p32
    %p34 = scmp.ne.s32.totalorder %s23, %s24
    %p35 = scmp.eq.s32.totalorder %s15, 0
    %p36 = por %p34, %p35
    %p37 = scmp.ne.s32.totalorder %s23, %s24
    %p38 = scmp.eq.s32.totalorder %s16, 1
    %p39 = por %p37, %p38
    %p41 = scmp.ne.s32.totalorder %s24, %s40
    %p42 = scmp.eq.s32.totalorder %s16, 0
    %p43 = por %p41, %p42
    %s45 = sadd.s32 %s44, 1
    %p48 = scmp.eq.s32.totalorder %s10, 1
    %p49 = scmp.ne.s32.totalorder %s44, %s46
    %p50 = scmp.eq.s32.totalorder %s10, 0
    %p51 = por %p49, %p50
    %p52 = scmp.ne.s32.totalorder %s44, %s46
    %p53 = scmp.eq.s32.totalorder %s15, 1
    %p54 = por %p52, %p53
    %p55 = scmp.ne.s32.totalorder %s46, %s47
    %p56 = scmp.eq.s32.totalorder %s15, 0
    %p57 = por %p55, %p56
    %p58 = scmp.ne.s32.totalorder %s46, %s47
    %p59 = scmp.eq.s32.totalorder %s16, 1
    %p60 = por %p58, %p59
    %p62 = scmp.ne.s32.totalorder %s47, %s61
    %p63 = scmp.eq.s32.totalorder %s16, 0
    %p64 = por %p62, %p63
    %s66 = sadd.s32 %s65, 1
    %p69 = scmp.eq.s32.totalorder %s10, 1
    %p70 = scmp.ne.s32.totalorder %s65, %s67
    %p71 = scmp.eq.s32.totalorder %s10, 0
    %p72 = por %p70, %p71
    %p73 = scmp.ne.s32.totalorder %s65, %s67
    %p74 = scmp.eq.s32.totalorder %s15, 1
    %p75 = por %p73, %p74
    %p76 = scmp.ne.s32.totalorder %s67, %s68
    %p77 = scmp.eq.s32.totalorder %s15, 0
    %p78 = por %p76, %p77
    %p79 = scmp.ne.s32.totalorder %s67, %s68
    %p80 = scmp.eq.s32.totalorder %s16, 1
    %p81 = por %p79, %p80
    %p83 = scmp.ne.s32.totalorder %s68, %s82
    %p84 = scmp.eq.s32.totalorder %s16, 0
    %p85 = por %p83, %p84
    %s87 = sadd.s32 %s86, 1
    %p90 = scmp.eq.s32.totalorder %s10, 1
    %p91 = scmp.ne.s32.totalorder %s86, %s88
    %p92 = scmp.eq.s32.totalorder %s10, 0
    %p93 = por %p91, %p92
    %p94 = scmp.ne.s32.totalorder %s86, %s88
    %p95 = scmp.eq.s32.totalorder %s15, 1
    %p96 = por %p94, %p95
    %p97 = scmp.ne.s32.totalorder %s88, %s89
    %p98 = scmp.eq.s32.totalorder %s15, 0
    %p99 = por %p97, %p98
    %p100 = scmp.ne.s32.totalorder %s88, %s89
    %p101 = scmp.eq.s32.totalorder %s16, 1
    %p102 = por %p100, %p101
    %p104 = scmp.ne.s32.totalorder %s89, %s103
    %p105 = scmp.eq.s32.totalorder %s16, 0
    %p106 = por %p104, %p105
    %s107 = ssub.s32 %s10, %s17
    %p108 = scmp.eq.s32.totalorder %s107, 0
    %s110 = sadd.s32 %s109, 1
    %s111 = scalar_select %p108, %s109, %s110
    %p114 = pneg %p108
    %p115 = scmp.eq.s32.totalorder %s10, 1
    %p116 = por %p114, %p115
    %p117 = scmp.ne.s32.totalorder %s109, %s112
    %p118 = scmp.eq.s32.totalorder %s10, 0
    %p119 = por %p117, %p118
    %p120 = scmp.ne.s32.totalorder %s109, %s112
    %p121 = scmp.eq.s32.totalorder %s15, 1
    %p122 = por %p120, %p121
    %p123 = scmp.ne.s32.totalorder %s112, %s113
    %p124 = scmp.eq.s32.totalorder %s15, 0
    %p125 = por %p123, %p124
    %p126 = scmp.ne.s32.totalorder %s112, %s113
    %p127 = scmp.eq.s32.totalorder %s16, 1
    %p128 = por %p126, %p127
    %p130 = scmp.ne.s32.totalorder %s113, %s129
    %p131 = scmp.eq.s32.totalorder %s16, 0
    %p132 = por %p130, %p131
    %p133 = scmp.le.s32.totalorder 1, %s10
    %p134 = scmp.lt.s32.totalorder %s10, 3
    %p135 = pnand %p133, %p134
    %p136 = pneg %p135
    // Predicated region
    $region9: #{eegnet_forward.1} parent=5 // pred_check
      _
    $region10: #{eegnet_forward.1} parent=5 // pred_check_branch
      %138 = sbr.rel (%p135) target = $region12
    $region11: #{eegnet_forward.1} parent=5 // pred_region
      %s139 = ssub.s32 %s10, 1
      // Predicated region
      $region13: #{eegnet_forward.1} parent=11 // pred_check
        %p140 = pneg %p57
      $region14: #{eegnet_forward.1} parent=11 // pred_check_branch
        %142 = sbr.rel (%p140) target = $region16
      $region15: #{eegnet_forward.1} parent=11 // pred_region
        _
      $region16: #{eegnet_forward.1} parent=11 // pred_fallthru
        _
      // Predicated region
      $region17: #{eegnet_forward.1} parent=11 // pred_check
        %p143 = pneg %p78
      $region18: #{eegnet_forward.1} parent=11 // pred_check_branch
        %145 = sbr.rel (%p143) target = $region20
      $region19: #{eegnet_forward.1} parent=11 // pred_region
        _
      $region20: #{eegnet_forward.1} parent=11 // pred_fallthru
        _
      // Predicated region
      $region21: #{eegnet_forward.1} parent=11 // pred_check
        %p146 = pneg %p99
      $region22: #{eegnet_forward.1} parent=11 // pred_check_branch
        %148 = sbr.rel (%p146) target = $region24
      $region23: #{eegnet_forward.1} parent=11 // pred_region
        _
      $region24: #{eegnet_forward.1} parent=11 // pred_fallthru
        _
    $region12: #{eegnet_forward.1} parent=5 // pred_fallthru
      _
    %p149 = scmp.lt.s32.totalorder %s10, 2
    // Predicated region
    $region25: #{eegnet_forward.1} parent=5 // pred_check
      %p150 = pneg %p149
    $region26: #{eegnet_forward.1} parent=5 // pred_check_branch
      %152 = sbr.rel (%p150) target = $region28
    $region27: #{eegnet_forward.1} parent=5 // pred_region
      // Predicated region
      $region29: #{eegnet_forward.1} parent=27 // pred_check
        %p153 = pneg %p30
      $region30: #{eegnet_forward.1} parent=27 // pred_check_branch
        %155 = sbr.rel (%p153) target = $region32
      $region31: #{eegnet_forward.1} parent=27 // pred_region
        %s156 = smul.u32 2, %s10
        %p157 = scmp.lt.s32.totalorder %s156, 3
        %s158 = scalar_select %p157, %s156, 3
        %s159 = smul.addr %s158, 2
        %s160 = smul.addr %s159, 8
        %s161 = scalar_lea.vmem %s0, %s160
        %s162 = smul.u32 2, %s10
      $region32: #{eegnet_forward.1} parent=27 // pred_fallthru
        _
    $region28: #{eegnet_forward.1} parent=5 // pred_fallthru
      _
    %p163 = scmp.le.s32.totalorder 1, %s10
    %p164 = scmp.lt.s32.totalorder %s10, 3
    %p165 = pnand %p163, %p164
    %p166 = pneg %p165
    // Predicated region
    $region33: #{eegnet_forward.1} parent=5 // pred_check
      _
    $region34: #{eegnet_forward.1} parent=5 // pred_check_branch
      %168 = sbr.rel (%p165) target = $region36
    $region35: #{eegnet_forward.1} parent=5 // pred_region
      %s169 = ssub.s32 %s10, 1
      %s170 = smul.u32 2, %s15
      %p171 = scmp.lt.s32.totalorder %s170, 3
      %s172 = scalar_select %p171, %s170, 3
      %s173 = smul.addr %s172, 2
      %s174 = smul.addr %s173, 8
      %s175 = scalar_lea.vmem %s0, %s174
      %p176 = pneg %p36
      %p177 = pneg %p33
      %p178 = pneg %p57
      %p179 = pneg %p54
      %p180 = pneg %p78
      %p181 = pneg %p75
      %p182 = pneg %p99
      %p183 = pneg %p96
      %p184 = pneg %p125
      %p185 = pneg %p122
      %p186 = scmp.lt.s32.totalorder %s15, 1
      %s187 = scalar_select %p186, %s15, 1
      %s188 = smul.addr %s187, 2
      %s189 = scalar_lea.vmem %s4, %s188
      %s190 = smul.u32 2, %s15
      %p191 = scmp.lt.s32.totalorder %s190, 3
      %s192 = scalar_select %p191, %s190, 3
      %s193 = smul.addr %s192, 2
      %s194 = smul.addr %s193, 8
      %s195 = scalar_lea.vmem %s0, %s194
      %s196 = smul.u32 2, %s15
      %p197 = scmp.lt.s32.totalorder %s15, 1
      %s198 = scalar_select %p197, %s15, 1
      %s199 = smul.addr %s198, 2
      %s200 = scalar_lea.vmem %s4, %s199
      %v201 = vld [vmem:[%s1] sm:$0xff]
      %v202 = vld [vmem:[%s2] sm:$0xff]
      %v203 = vld [vmem:[%s2 + $0x8] sm:$0xff]
      %v204 = vld [vmem:[%s2 + $0x10] sm:$0xff]
      %v205 = vld [vmem:[%s2 + $0x18] sm:$0xff]
      %v206 = vld [vmem:[%s2 + $0x20] sm:$0xff]
      %v207 = vld [vmem:[%s2 + $0x28] sm:$0xff]
      %v208 = vld [vmem:[%s2 + $0x30] sm:$0xff]
      %v209 = vld [vmem:[%s2 + $0x38] sm:$0xff]
      %v210 = vld [vmem:[%s2 + $0x40] sm:$0xff]
      %v211 = vld [vmem:[%s2 + $0x48] sm:$0xff]
      %v212 = vld [vmem:[%s2 + $0x50] sm:$0xff]
      %v213 = vld [vmem:[%s2 + $0x58] sm:$0xff]
      %v214 = vld [vmem:[%s2 + $0x60] sm:$0xff]
      %v215 = vld [vmem:[%s2 + $0x68] sm:$0xff]
      %v216 = vld [vmem:[%s2 + $0x70] sm:$0xff]
      %v217 = vld [vmem:[%s2 + $0x78] sm:$0xff]
      %v218 = vld [vmem:[%s3] sm:$0xff]
      %v219 = vld [vmem:[%s3 + $0x8] sm:$0xff]
      %v220 = vld [vmem:[%s3 + $0x10] sm:$0xff]
      %v221 = vld [vmem:[%s3 + $0x18] sm:$0xff]
      %v222 = vld [vmem:[%s195] sm:$0xff]
      %v223 = vld [vmem:[%s195 + $0x8] sm:$0xff]
      %226 = vrot.lane.b32.xlu0 %v222, 127
      %v227 = vpop.permute.xlu0 %226
      %228 = vrot.lane.b32.xlu0 %v223, 127
      %v229 = vpop.permute.xlu0 %228
      %vm230 = vcmask 1039360
      %v231 = vsel %vm230, %v227, %v229
      %233 = vrot.lane.b32.xlu0 %v222, 126
      %v234 = vpop.permute.xlu0 %233
      %235 = vrot.lane.b32.xlu0 %v223, 126
      %v236 = vpop.permute.xlu0 %235
      %vm237 = vcmask 1031168
      %v238 = vsel %vm237, %v234, %v236
      %240 = vrot.lane.b32.xlu0 %v222, 125
      %v241 = vpop.permute.xlu0 %240
      %242 = vrot.lane.b32.xlu0 %v223, 125
      %v243 = vpop.permute.xlu0 %242
      %vm244 = vcmask 1022976
      %v245 = vsel %vm244, %v241, %v243
      %247 = vrot.lane.b32.xlu0 %v222, 124
      %v248 = vpop.permute.xlu0 %247
      %249 = vrot.lane.b32.xlu0 %v223, 124
      %v250 = vpop.permute.xlu0 %249
      %vm251 = vcmask 1014784
      %v252 = vsel %vm251, %v248, %v250
      %254 = vrot.lane.b32.xlu0 %v222, 123
      %v255 = vpop.permute.xlu0 %254
      %256 = vrot.lane.b32.xlu0 %v223, 123
      %v257 = vpop.permute.xlu0 %256
      %vm258 = vcmask 1006592
      %v259 = vsel %vm258, %v255, %v257
      %261 = vrot.lane.b32.xlu0 %v222, 122
      %v262 = vpop.permute.xlu0 %261
      %263 = vrot.lane.b32.xlu0 %v223, 122
      %v264 = vpop.permute.xlu0 %263
      %vm265 = vcmask 998400
      %v266 = vsel %vm265, %v262, %v264
      %268 = vrot.lane.b32.xlu0 %v222, 121
      %v269 = vpop.permute.xlu0 %268
      %270 = vrot.lane.b32.xlu0 %v223, 121
      %v271 = vpop.permute.xlu0 %270
      %vm272 = vcmask 990208
      %v273 = vsel %vm272, %v269, %v271
      %276 = vset.pattern.permute.xlu0 72
      %277 = vperm.xlu0 %276, %v201
      %v278 = vpop.permute.xlu0 %277
      %vm280 = vcmask 523264
      %v281 = vsel %vm280, %v201, 0
      %283 = vmatprep.subr.mxu0 0.0
      %284 = vmatpush1.msra.mxu0 %v222
      %285 = vmatprep.subr.mxu0 0.0
      %286 = vmatpush1.msra.mxu0 %v231
      %287 = vmatprep.subr.mxu0 0.0
      %288 = vmatpush1.msra.mxu0 %v238
      %289 = vmatprep.subr.mxu0 0.0
      %290 = vmatpush1.msra.mxu0 %v245
      %291 = vmatprep.subr.mxu0 0.0
      %292 = vmatpush1.msra.mxu0 %v252
      %293 = vmatprep.subr.mxu0 0.0
      %294 = vmatpush1.msra.mxu0 %v259
      %295 = vmatprep.subr.mxu0 0.0
      %296 = vmatpush1.msra.mxu0 %v266
      %297 = vmatprep.subr.mxu0 0.0
      %298 = vmatpush1.msra.mxu0 %v273
      %299 = vmatprep.subr.mxu0 0.0
      %300 = vmatpush1.msra.mxu0 0.0
      %301 = vmatprep.subr.mxu0 0.0
      %302 = vmatpush1.msra.mxu0 0.0
      %303 = vmatprep.subr.mxu0 0.0
      %304 = vmatpush1.msra.mxu0 0.0
      %305 = vmatprep.subr.mxu0 0.0
      %306 = vmatpush1.msra.mxu0 0.0
      %307 = vmatprep.subr.mxu0 0.0
      %308 = vmatpush1.msra.mxu0 0.0
      %309 = vmatprep.subr.mxu0 0.0
      %310 = vmatpush1.msra.mxu0 0.0
      %311 = vmatprep.subr.mxu0 0.0
      %312 = vmatpush1.msra.mxu0 0.0
      %313 = vmatprep.subr.mxu0 0.0
      %314 = vmatpush1.msra.mxu0 0.0
      %315 = vmatprep.subr.mxu0 0.0
      %316 = vmatpush1.msra.mxu0 0.0
      %317 = vmatprep.subr.mxu0 0.0
      %318 = vmatpush1.msra.mxu0 0.0
      %319 = vmatprep.subr.mxu0 0.0
      %320 = vmatpush1.msra.mxu0 0.0
      %321 = vmatprep.subr.mxu0 0.0
      %322 = vmatpush1.msra.mxu0 0.0
      %323 = vmatprep.subr.mxu0 0.0
      %324 = vmatpush1.msra.mxu0 0.0
      %325 = vmatprep.subr.mxu0 0.0
      %326 = vmatpush1.msra.mxu0 0.0
      %327 = vmatprep.subr.mxu0 0.0
      %328 = vmatpush1.msra.mxu0 0.0
      %329 = vmatprep.subr.mxu0 0.0
      %330 = vmatpush1.msra.mxu0 0.0
      %331 = vmatprep.subr.mxu0 0.0
      %332 = vmatpush1.msra.mxu0 0.0
      %333 = vmatprep.subr.mxu0 0.0
      %334 = vmatpush1.msra.mxu0 0.0
      %335 = vmatprep.subr.mxu0 0.0
      %336 = vmatpush1.msra.mxu0 0.0
      %337 = vmatprep.subr.mxu0 0.0
      %338 = vmatpush1.msra.mxu0 0.0
      %339 = vmatprep.subr.mxu0 0.0
      %340 = vmatpush1.msra.mxu0 0.0
      %341 = vmatprep.subr.mxu0 0.0
      %342 = vmatpush1.msra.mxu0 0.0
      %343 = vmatprep.subr.mxu0 0.0
      %344 = vmatpush1.msra.mxu0 0.0
      %345 = vmatprep.subr.mxu0 0.0
      %346 = vmatpush1.msra.mxu0 0.0
      %347 = vmatprep.mubr.f32.mxu0 0.0
      %348 = vmatmul.mubr.f32.gmra.mrb[0].mxu0 %v281
      %v349 = vpop.f32.mrb[0].mxu0
      %v350 = vadd.f32 %v278, %v349
      %v351 = vpop.f32.mrb[0].mxu0
      %352 = vdwg.mxu0
      %vm353 = vcmp.gt.f32.partialorder %v350, 0.0
      %v354 = vmin.f32 %v350, 0.0
      %v355 = vmul.f32 %v354, 1.442695
      %v356 = vpow.pop %v355
      %v357 = vsub.f32 %v356, 1.0
      %v358 = vsel %vm353, %v350, %v357
      %359 = vmatprep.subr.mxu0 0.0
      %360 = vmatpush1.msra.mxu0 %v202
      %361 = vmatprep.subr.mxu0 0.0
      %362 = vmatpush1.msra.mxu0 %v203
      %363 = vmatprep.subr.mxu0 0.0
      %364 = vmatpush1.msra.mxu0 %v204
      %365 = vmatprep.subr.mxu0 0.0
      %366 = vmatpush1.msra.mxu0 %v205
      %367 = vmatprep.subr.mxu0 0.0
      %368 = vmatpush1.msra.mxu0 %v206
      %369 = vmatprep.subr.mxu0 0.0
      %370 = vmatpush1.msra.mxu0 %v207
      %371 = vmatprep.subr.mxu0 0.0
      %372 = vmatpush1.msra.mxu0 %v208
      %373 = vmatprep.subr.mxu0 0.0
      %374 = vmatpush1.msra.mxu0 %v209
      %375 = vmatprep.subr.mxu0 0.0
      %376 = vmatpush1.msra.mxu0 %v210
      %377 = vmatprep.subr.mxu0 0.0
      %378 = vmatpush1.msra.mxu0 %v211
      %379 = vmatprep.subr.mxu0 0.0
      %380 = vmatpush1.msra.mxu0 %v212
      %381 = vmatprep.subr.mxu0 0.0
      %382 = vmatpush1.msra.mxu0 %v213
      %383 = vmatprep.subr.mxu0 0.0
      %384 = vmatpush1.msra.mxu0 %v214
      %385 = vmatprep.subr.mxu0 0.0
      %386 = vmatpush1.msra.mxu0 %v215
      %387 = vmatprep.subr.mxu0 0.0
      %388 = vmatpush1.msra.mxu0 %v216
      %389 = vmatprep.subr.mxu0 0.0
      %390 = vmatpush1.msra.mxu0 %v217
      %391 = vmatprep.subr.mxu0 0.0
      %392 = vmatpush1.msra.mxu0 0.0
      %393 = vmatprep.subr.mxu0 0.0
      %394 = vmatpush1.msra.mxu0 0.0
      %395 = vmatprep.subr.mxu0 0.0
      %396 = vmatpush1.msra.mxu0 0.0
      %397 = vmatprep.subr.mxu0 0.0
      %398 = vmatpush1.msra.mxu0 0.0
      %399 = vmatprep.subr.mxu0 0.0
      %400 = vmatpush1.msra.mxu0 0.0
      %401 = vmatprep.subr.mxu0 0.0
      %402 = vmatpush1.msra.mxu0 0.0
      %403 = vmatprep.subr.mxu0 0.0
      %404 = vmatpush1.msra.mxu0 0.0
      %405 = vmatprep.subr.mxu0 0.0
      %406 = vmatpush1.msra.mxu0 0.0
      %407 = vmatprep.subr.mxu0 0.0
      %408 = vmatpush1.msra.mxu0 0.0
      %409 = vmatprep.subr.mxu0 0.0
      %410 = vmatpush1.msra.mxu0 0.0
      %411 = vmatprep.subr.mxu0 0.0
      %412 = vmatpush1.msra.mxu0 0.0
      %413 = vmatprep.subr.mxu0 0.0
      %414 = vmatpush1.msra.mxu0 0.0
      %415 = vmatprep.subr.mxu0 0.0
      %416 = vmatpush1.msra.mxu0 0.0
      %417 = vmatprep.subr.mxu0 0.0
      %418 = vmatpush1.msra.mxu0 0.0
      %419 = vmatprep.subr.mxu0 0.0
      %420 = vmatpush1.msra.mxu0 0.0
      %421 = vmatprep.subr.mxu0 0.0
      %422 = vmatpush1.msra.mxu0 0.0
      %423 = vmatprep.mubr.f32.mxu0 0.0
      %424 = vmatmul.mubr.f32.gmra.mrb[0].mxu0 %v358
      %v425 = vpop.f32.mrb[0].mxu0
      %v426 = vadd.f32 0.0, %v425
      %v427 = vpop.f32.mrb[0].mxu0
      %428 = vdwg.mxu0
      %430 = vrot.lane.b32.xlu0 %v426, 2
      %v431 = vpop.permute.xlu0 %430
      %vm433 = vcmask 15360
      %v434 = vsel %vm433, 0.0, %v431
      %435 = vset.pattern.permute.xlu0 74
      %436 = vperm.xlu0 %435, %v201
      %v437 = vpop.permute.xlu0 %436
      %v439 = vmul.f32 %v437, %v434
      %v440 = vadd.f32 %v439, 0.0
      %441 = vrot.lane.b32.xlu0 %v426, 1
      %v442 = vpop.permute.xlu0 %441
      %vm444 = vcmask 7168
      %v445 = vsel %vm444, 0.0, %v442
      %446 = vset.pattern.permute.xlu0 75
      %447 = vperm.xlu0 %446, %v201
      %v448 = vpop.permute.xlu0 %447
      %v450 = vmul.f32 %v448, %v445
      %v451 = vadd.f32 %v440, %v450
      %452 = vset.pattern.permute.xlu0 76
      %453 = vperm.xlu0 %452, %v201
      %v454 = vpop.permute.xlu0 %453
      %v456 = vmul.f32 %v454, %v426
      %v457 = vadd.f32 %v451, %v456
      %458 = vrot.lane.b32.xlu0 %v426, 127
      %v459 = vpop.permute.xlu0 %458
      %vm461 = vcmask 252928
      %v462 = vsel %vm461, %v459, 0.0
      %463 = vset.pattern.permute.xlu0 77
      %464 = vperm.xlu0 %463, %v201
      %v465 = vpop.permute.xlu0 %464
      %v467 = vmul.f32 %v465, %v462
      %v468 = vadd.f32 %v457, %v467
      %469 = vset.pattern.permute.xlu0 73
      %470 = vperm.xlu0 %469, %v201
      %v471 = vpop.permute.xlu0 %470
      %473 = vrot.lane.b32.xlu0 %v201, 64
      %v474 = vpop.permute.xlu0 %473
      %vm475 = vcmask 64512
      %v476 = vsel %vm475, %v474, 0
      %478 = vmatprep.subr.mxu0 0.0
      %479 = vmatpush1.msra.mxu0 %v468
      %480 = vmatprep.subr.mxu0 0.0
      %481 = vmatpush1.msra.mxu0 0.0
      %482 = vmatprep.subr.mxu0 0.0
      %483 = vmatpush1.msra.mxu0 0.0
      %484 = vmatprep.subr.mxu0 0.0
      %485 = vmatpush1.msra.mxu0 0.0
      %486 = vmatprep.subr.mxu0 0.0
      %487 = vmatpush1.msra.mxu0 0.0
      %488 = vmatprep.subr.mxu0 0.0
      %489 = vmatpush1.msra.mxu0 0.0
      %490 = vmatprep.subr.mxu0 0.0
      %491 = vmatpush1.msra.mxu0 0.0
      %492 = vmatprep.subr.mxu0 0.0
      %493 = vmatpush1.msra.mxu0 0.0
      %494 = vmatprep.subr.mxu0 0.0
      %495 = vmatpush1.msra.mxu0 0.0
      %496 = vmatprep.subr.mxu0 0.0
      %497 = vmatpush1.msra.mxu0 0.0
      %498 = vmatprep.subr.mxu0 0.0
      %499 = vmatpush1.msra.mxu0 0.0
      %500 = vmatprep.subr.mxu0 0.0
      %501 = vmatpush1.msra.mxu0 0.0
      %502 = vmatprep.subr.mxu0 0.0
      %503 = vmatpush1.msra.mxu0 0.0
      %504 = vmatprep.subr.mxu0 0.0
      %505 = vmatpush1.msra.mxu0 0.0
      %506 = vmatprep.subr.mxu0 0.0
      %507 = vmatpush1.msra.mxu0 0.0
      %508 = vmatprep.subr.mxu0 0.0
      %509 = vmatpush1.msra.mxu0 0.0
      %510 = vmatprep.subr.mxu0 0.0
      %511 = vmatpush1.msra.mxu0 0.0
      %512 = vmatprep.subr.mxu0 0.0
      %513 = vmatpush1.msra.mxu0 0.0
      %514 = vmatprep.subr.mxu0 0.0
      %515 = vmatpush1.msra.mxu0 0.0
      %516 = vmatprep.subr.mxu0 0.0
      %517 = vmatpush1.msra.mxu0 0.0
      %518 = vmatprep.subr.mxu0 0.0
      %519 = vmatpush1.msra.mxu0 0.0
      %520 = vmatprep.subr.mxu0 0.0
      %521 = vmatpush1.msra.mxu0 0.0
      %522 = vmatprep.subr.mxu0 0.0
      %523 = vmatpush1.msra.mxu0 0.0
      %524 = vmatprep.subr.mxu0 0.0
      %525 = vmatpush1.msra.mxu0 0.0
      %526 = vmatprep.subr.mxu0 0.0
      %527 = vmatpush1.msra.mxu0 0.0
      %528 = vmatprep.subr.mxu0 0.0
      %529 = vmatpush1.msra.mxu0 0.0
      %530 = vmatprep.subr.mxu0 0.0
      %531 = vmatpush1.msra.mxu0 0.0
      %532 = vmatprep.subr.mxu0 0.0
      %533 = vmatpush1.msra.mxu0 0.0
      %534 = vmatprep.subr.mxu0 0.0
      %535 = vmatpush1.msra.mxu0 0.0
      %536 = vmatprep.subr.mxu0 0.0
      %537 = vmatpush1.msra.mxu0 0.0
      %538 = vmatprep.subr.mxu0 0.0
      %539 = vmatpush1.msra.mxu0 0.0
      %540 = vmatprep.subr.mxu0 0.0
      %541 = vmatpush1.msra.mxu0 0.0
      %542 = vmatprep.mubr.f32.mxu0 0.0
      %543 = vmatmul.mubr.f32.gmra.mrb[0].mxu0 %v476
      %v544 = vpop.f32.mrb[0].mxu0
      %v545 = vadd.f32 %v471, %v544
      %v546 = vpop.f32.mrb[0].mxu0
      %547 = vdwg.mxu0
      %vm548 = vcmp.gt.f32.partialorder %v545, 0.0
      %v549 = vmin.f32 %v545, 0.0
      %v550 = vmul.f32 %v549, 1.442695
      %v551 = vpow.pop %v550
      %v552 = vsub.f32 %v551, 1.0
      %v553 = vsel %vm548, %v545, %v552
      %vm554 = vcmask 261120
      %v556 = vsel %vm554, %v553, 0
      %558 = vmatprep.subr.mxu0 0.0
      %559 = vmatpush1.msra.mxu0 %v218
      %560 = vmatprep.subr.mxu0 0.0
      %561 = vmatpush1.msra.mxu0 %v219
      %562 = vmatprep.subr.mxu0 0.0
      %563 = vmatpush1.msra.mxu0 %v220
      %564 = vmatprep.subr.mxu0 0.0
      %565 = vmatpush1.msra.mxu0 %v221
      %566 = vmatprep.subr.mxu0 0.0
      %567 = vmatpush1.msra.mxu0 0.0
      %568 = vmatprep.subr.mxu0 0.0
      %569 = vmatpush1.msra.mxu0 0.0
      %570 = vmatprep.subr.mxu0 0.0
      %571 = vmatpush1.msra.mxu0 0.0
      %572 = vmatprep.subr.mxu0 0.0
      %573 = vmatpush1.msra.mxu0 0.0
      %574 = vmatprep.subr.mxu0 0.0
      %575 = vmatpush1.msra.mxu0 0.0
      %576 = vmatprep.subr.mxu0 0.0
      %577 = vmatpush1.msra.mxu0 0.0
      %578 = vmatprep.subr.mxu0 0.0
      %579 = vmatpush1.msra.mxu0 0.0
      %580 = vmatprep.subr.mxu0 0.0
      %581 = vmatpush1.msra.mxu0 0.0
      %582 = vmatprep.subr.mxu0 0.0
      %583 = vmatpush1.msra.mxu0 0.0
      %584 = vmatprep.subr.mxu0 0.0
      %585 = vmatpush1.msra.mxu0 0.0
      %586 = vmatprep.subr.mxu0 0.0
      %587 = vmatpush1.msra.mxu0 0.0
      %588 = vmatprep.subr.mxu0 0.0
      %589 = vmatpush1.msra.mxu0 0.0
      %590 = vmatprep.subr.mxu0 0.0
      %591 = vmatpush1.msra.mxu0 0.0
      %592 = vmatprep.subr.mxu0 0.0
      %593 = vmatpush1.msra.mxu0 0.0
      %594 = vmatprep.subr.mxu0 0.0
      %595 = vmatpush1.msra.mxu0 0.0
      %596 = vmatprep.subr.mxu0 0.0
      %597 = vmatpush1.msra.mxu0 0.0
      %598 = vmatprep.subr.mxu0 0.0
      %599 = vmatpush1.msra.mxu0 0.0
      %600 = vmatprep.subr.mxu0 0.0
      %601 = vmatpush1.msra.mxu0 0.0
      %602 = vmatprep.subr.mxu0 0.0
      %603 = vmatpush1.msra.mxu0 0.0
      %604 = vmatprep.subr.mxu0 0.0
      %605 = vmatpush1.msra.mxu0 0.0
      %606 = vmatprep.subr.mxu0 0.0
      %607 = vmatpush1.msra.mxu0 0.0
      %608 = vmatprep.subr.mxu0 0.0
      %609 = vmatpush1.msra.mxu0 0.0
      %610 = vmatprep.subr.mxu0 0.0
      %611 = vmatpush1.msra.mxu0 0.0
      %612 = vmatprep.subr.mxu0 0.0
      %613 = vmatpush1.msra.mxu0 0.0
      %614 = vmatprep.subr.mxu0 0.0
      %615 = vmatpush1.msra.mxu0 0.0
      %616 = vmatprep.subr.mxu0 0.0
      %617 = vmatpush1.msra.mxu0 0.0
      %618 = vmatprep.subr.mxu0 0.0
      %619 = vmatpush1.msra.mxu0 0.0
      %620 = vmatprep.subr.mxu0 0.0
      %621 = vmatpush1.msra.mxu0 0.0
      %622 = vmatprep.mubr.f32.mxu0 0.0
      %623 = vmatmul.mubr.f32.gmra.mrb[0].mxu0 %v556
      %v624 = vpop.f32.mrb[0].mxu0
      %v625 = vadd.f32 0.0, %v624
      %v626 = vpop.f32.mrb[0].mxu0
      %627 = vdwg.mxu0
      %v629 = vrot.slane %v625, 1
      %630 = vrot.lane.b32.xlu0 %v629, 4
      %v631 = vpop.permute.xlu0 %630
      %v633 = vrot.slane %v625, 2
      %634 = vrot.lane.b32.xlu0 %v633, 8
      %v635 = vpop.permute.xlu0 %634
      %v637 = vrot.slane %v625, 3
      %638 = vrot.lane.b32.xlu0 %v637, 12
      %v639 = vpop.permute.xlu0 %638
      %v641 = vrot.slane %v625, 4
      %642 = vrot.lane.b32.xlu0 %v641, 16
      %v643 = vpop.permute.xlu0 %642
      %v645 = vrot.slane %v625, 5
      %646 = vrot.lane.b32.xlu0 %v645, 20
      %v647 = vpop.permute.xlu0 %646
      %v649 = vrot.slane %v625, 6
      %650 = vrot.lane.b32.xlu0 %v649, 24
      %v651 = vpop.permute.xlu0 %650
      %v653 = vrot.slane %v625, 7
      %654 = vrot.lane.b32.xlu0 %v653, 28
      %v655 = vpop.permute.xlu0 %654
      %vm657 = vcmask 31744
      %v658 = vsel %vm657, %v625, %v631
      %v659 = vsel %vm475, %v658, %v635
      %vm660 = vcmask 97280
      %v661 = vsel %vm660, %v659, %v639
      %vm662 = vcmask 130048
      %v663 = vsel %vm662, %v661, %v643
      %vm664 = vcmask 162816
      %v665 = vsel %vm664, %v663, %v647
      %vm666 = vcmask 195584
      %v667 = vsel %vm666, %v665, %v651
      %vm668 = vcmask 228352
      %v669 = vsel %vm668, %v667, %v655
      %s670 = scalar_lea.vmem %s195, 16
      %v671 = vld [vmem:[%s670] sm:$0xff]
      %v672 = vld [vmem:[%s670 + $0x8] sm:$0xff]
      %675 = vrot.lane.b32.xlu0 %v671, 127
      %v676 = vpop.permute.xlu0 %675
      %677 = vrot.lane.b32.xlu0 %v672, 127
      %v678 = vpop.permute.xlu0 %677
      %v679 = vsel %vm230, %v676, %v678
      %681 = vrot.lane.b32.xlu0 %v671, 126
      %v682 = vpop.permute.xlu0 %681
      %683 = vrot.lane.b32.xlu0 %v672, 126
      %v684 = vpop.permute.xlu0 %683
      %v685 = vsel %vm237, %v682, %v684
      %687 = vrot.lane.b32.xlu0 %v671, 125
      %v688 = vpop.permute.xlu0 %687
      %689 = vrot.lane.b32.xlu0 %v672, 125
      %v690 = vpop.permute.xlu0 %689
      %v691 = vsel %vm244, %v688, %v690
      %693 = vrot.lane.b32.xlu0 %v671, 124
      %v694 = vpop.permute.xlu0 %693
      %695 = vrot.lane.b32.xlu0 %v672, 124
      %v696 = vpop.permute.xlu0 %695
      %v697 = vsel %vm251, %v694, %v696
      %699 = vrot.lane.b32.xlu0 %v671, 123
      %v700 = vpop.permute.xlu0 %699
      %701 = vrot.lane.b32.xlu0 %v672, 123
      %v702 = vpop.permute.xlu0 %701
      %v703 = vsel %vm258, %v700, %v702
      %705 = vrot.lane.b32.xlu0 %v671, 122
      %v706 = vpop.permute.xlu0 %705
      %707 = vrot.lane.b32.xlu0 %v672, 122
      %v708 = vpop.permute.xlu0 %707
      %v709 = vsel %vm265, %v706, %v708
      %711 = vrot.lane.b32.xlu0 %v671, 121
      %v712 = vpop.permute.xlu0 %711
      %713 = vrot.lane.b32.xlu0 %v672, 121
      %v714 = vpop.permute.xlu0 %713
      %v715 = vsel %vm272, %v712, %v714
      %717 = vmatprep.subr.mxu0 0.0
      %718 = vmatpush1.msra.mxu0 %v671
      %719 = vmatprep.subr.mxu0 0.0
      %720 = vmatpush1.msra.mxu0 %v679
      %721 = vmatprep.subr.mxu0 0.0
      %722 = vmatpush1.msra.mxu0 %v685
      %723 = vmatprep.subr.mxu0 0.0
      %724 = vmatpush1.msra.mxu0 %v691
      %725 = vmatprep.subr.mxu0 0.0
      %726 = vmatpush1.msra.mxu0 %v697
      %727 = vmatprep.subr.mxu0 0.0
      %728 = vmatpush1.msra.mxu0 %v703
      %729 = vmatprep.subr.mxu0 0.0
      %730 = vmatpush1.msra.mxu0 %v709
      %731 = vmatprep.subr.mxu0 0.0
      %732 = vmatpush1.msra.mxu0 %v715
      %733 = vmatprep.subr.mxu0 0.0
      %734 = vmatpush1.msra.mxu0 0.0
      %735 = vmatprep.subr.mxu0 0.0
      %736 = vmatpush1.msra.mxu0 0.0
      %737 = vmatprep.subr.mxu0 0.0
      %738 = vmatpush1.msra.mxu0 0.0
      %739 = vmatprep.subr.mxu0 0.0
      %740 = vmatpush1.msra.mxu0 0.0
      %741 = vmatprep.subr.mxu0 0.0
      %742 = vmatpush1.msra.mxu0 0.0
      %743 = vmatprep.subr.mxu0 0.0
      %744 = vmatpush1.msra.mxu0 0.0
      %745 = vmatprep.subr.mxu0 0.0
      %746 = vmatpush1.msra.mxu0 0.0
      %747 = vmatprep.subr.mxu0 0.0
      %748 = vmatpush1.msra.mxu0 0.0
      %749 = vmatprep.subr.mxu0 0.0
      %750 = vmatpush1.msra.mxu0 0.0
      %751 = vmatprep.subr.mxu0 0.0
      %752 = vmatpush1.msra.mxu0 0.0
      %753 = vmatprep.subr.mxu0 0.0
      %754 = vmatpush1.msra.mxu0 0.0
      %755 = vmatprep.subr.mxu0 0.0
      %756 = vmatpush1.msra.mxu0 0.0
      %757 = vmatprep.subr.mxu0 0.0
      %758 = vmatpush1.msra.mxu0 0.0
      %759 = vmatprep.subr.mxu0 0.0
      %760 = vmatpush1.msra.mxu0 0.0
      %761 = vmatprep.subr.mxu0 0.0
      %762 = vmatpush1.msra.mxu0 0.0
      %763 = vmatprep.subr.mxu0 0.0
      %764 = vmatpush1.msra.mxu0 0.0
      %765 = vmatprep.subr.mxu0 0.0
      %766 = vmatpush1.msra.mxu0 0.0
      %767 = vmatprep.subr.mxu0 0.0
      %768 = vmatpush1.msra.mxu0 0.0
      %769 = vmatprep.subr.mxu0 0.0
      %770 = vmatpush1.msra.mxu0 0.0
      %771 = vmatprep.subr.mxu0 0.0
      %772 = vmatpush1.msra.mxu0 0.0
      %773 = vmatprep.subr.mxu0 0.0
      %774 = vmatpush1.msra.mxu0 0.0
      %775 = vmatprep.subr.mxu0 0.0
      %776 = vmatpush1.msra.mxu0 0.0
      %777 = vmatprep.subr.mxu0 0.0
      %778 = vmatpush1.msra.mxu0 0.0
      %779 = vmatprep.subr.mxu0 0.0
      %780 = vmatpush1.msra.mxu0 0.0
      %781 = vmatprep.mubr.f32.mxu0 0.0
      %782 = vmatmul.mubr.f32.gmra.mrb[0].mxu0 %v281
      %v783 = vpop.f32.mrb[0].mxu0
      %v784 = vadd.f32 %v278, %v783
      %v785 = vpop.f32.mrb[0].mxu0
      %786 = vdwg.mxu0
      %vm787 = vcmp.gt.f32.partialorder %v784, 0.0
      %v788 = vmin.f32 %v784, 0.0
      %v789 = vmul.f32 %v788, 1.442695
      %v790 = vpow.pop %v789
      %v791 = vsub.f32 %v790, 1.0
      %v792 = vsel %vm787, %v784, %v791
      %793 = vmatprep.subr.mxu0 0.0
      %794 = vmatpush1.msra.mxu0 %v202
      %795 = vmatprep.subr.mxu0 0.0
      %796 = vmatpush1.msra.mxu0 %v203
      %797 = vmatprep.subr.mxu0 0.0
      %798 = vmatpush1.msra.mxu0 %v204
      %799 = vmatprep.subr.mxu0 0.0
      %800 = vmatpush1.msra.mxu0 %v205
      %801 = vmatprep.subr.mxu0 0.0
      %802 = vmatpush1.msra.mxu0 %v206
      %803 = vmatprep.subr.mxu0 0.0
      %804 = vmatpush1.msra.mxu0 %v207
      %805 = vmatprep.subr.mxu0 0.0
      %806 = vmatpush1.msra.mxu0 %v208
      %807 = vmatprep.subr.mxu0 0.0
      %808 = vmatpush1.msra.mxu0 %v209
      %809 = vmatprep.subr.mxu0 0.0
      %810 = vmatpush1.msra.mxu0 %v210
      %811 = vmatprep.subr.mxu0 0.0
      %812 = vmatpush1.msra.mxu0 %v211
      %813 = vmatprep.subr.mxu0 0.0
      %814 = vmatpush1.msra.mxu0 %v212
      %815 = vmatprep.subr.mxu0 0.0
      %816 = vmatpush1.msra.mxu0 %v213
      %817 = vmatprep.subr.mxu0 0.0
      %818 = vmatpush1.msra.mxu0 %v214
      %819 = vmatprep.subr.mxu0 0.0
      %820 = vmatpush1.msra.mxu0 %v215
      %821 = vmatprep.subr.mxu0 0.0
      %822 = vmatpush1.msra.mxu0 %v216
      %823 = vmatprep.subr.mxu0 0.0
      %824 = vmatpush1.msra.mxu0 %v217
      %825 = vmatprep.subr.mxu0 0.0
      %826 = vmatpush1.msra.mxu0 0.0
      %827 = vmatprep.subr.mxu0 0.0
      %828 = vmatpush1.msra.mxu0 0.0
      %829 = vmatprep.subr.mxu0 0.0
      %830 = vmatpush1.msra.mxu0 0.0
      %831 = vmatprep.subr.mxu0 0.0
      %832 = vmatpush1.msra.mxu0 0.0
      %833 = vmatprep.subr.mxu0 0.0
      %834 = vmatpush1.msra.mxu0 0.0
      %835 = vmatprep.subr.mxu0 0.0
      %836 = vmatpush1.msra.mxu0 0.0
      %837 = vmatprep.subr.mxu0 0.0
      %838 = vmatpush1.msra.mxu0 0.0
      %839 = vmatprep.subr.mxu0 0.0
      %840 = vmatpush1.msra.mxu0 0.0
      %841 = vmatprep.subr.mxu0 0.0
      %842 = vmatpush1.msra.mxu0 0.0
      %843 = vmatprep.subr.mxu0 0.0
      %844 = vmatpush1.msra.mxu0 0.0
      %845 = vmatprep.subr.mxu0 0.0
      %846 = vmatpush1.msra.mxu0 0.0
      %847 = vmatprep.subr.mxu0 0.0
      %848 = vmatpush1.msra.mxu0 0.0
      %849 = vmatprep.subr.mxu0 0.0
      %850 = vmatpush1.msra.mxu0 0.0
      %851 = vmatprep.subr.mxu0 0.0
      %852 = vmatpush1.msra.mxu0 0.0
      %853 = vmatprep.subr.mxu0 0.0
      %854 = vmatpush1.msra.mxu0 0.0
      %855 = vmatprep.subr.mxu0 0.0
      %856 = vmatpush1.msra.mxu0 0.0
      %857 = vmatprep.mubr.f32.mxu0 0.0
      %858 = vmatmul.mubr.f32.gmra.mrb[0].mxu0 %v792
      %v859 = vpop.f32.mrb[0].mxu0
      %v860 = vadd.f32 0.0, %v859
      %v861 = vpop.f32.mrb[0].mxu0
      %862 = vdwg.mxu0
      %864 = vrot.lane.b32.xlu0 %v860, 2
      %v865 = vpop.permute.xlu0 %864
      %v867 = vsel %vm433, 0.0, %v865
      %v868 = vmul.f32 %v437, %v867
      %v869 = vadd.f32 %v868, 0.0
      %870 = vrot.lane.b32.xlu0 %v860, 1
      %v871 = vpop.permute.xlu0 %870
      %v873 = vsel %vm444, 0.0, %v871
      %v874 = vmul.f32 %v448, %v873
      %v875 = vadd.f32 %v869, %v874
      %v876 = vmul.f32 %v454, %v860
      %v877 = vadd.f32 %v875, %v876
      %878 = vrot.lane.b32.xlu0 %v860, 127
      %v879 = vpop.permute.xlu0 %878
      %v881 = vsel %vm461, %v879, 0.0
      %v882 = vmul.f32 %v465, %v881
      %v883 = vadd.f32 %v877, %v882
      %884 = vmatprep.subr.mxu0 0.0
      %885 = vmatpush1.msra.mxu0 %v883
      %886 = vmatprep.subr.mxu0 0.0
      %887 = vmatpush1.msra.mxu0 0.0
      %888 = vmatprep.subr.mxu0 0.0
      %889 = vmatpush1.msra.mxu0 0.0
      %890 = vmatprep.subr.mxu0 0.0
      %891 = vmatpush1.msra.mxu0 0.0
      %892 = vmatprep.subr.mxu0 0.0
      %893 = vmatpush1.msra.mxu0 0.0
      %894 = vmatprep.subr.mxu0 0.0
      %895 = vmatpush1.msra.mxu0 0.0
      %896 = vmatprep.subr.mxu0 0.0
      %897 = vmatpush1.msra.mxu0 0.0
      %898 = vmatprep.subr.mxu0 0.0
      %899 = vmatpush1.msra.mxu0 0.0
      %900 = vmatprep.subr.mxu0 0.0
      %901 = vmatpush1.msra.mxu0 0.0
      %902 = vmatprep.subr.mxu0 0.0
      %903 = vmatpush1.msra.mxu0 0.0
      %904 = vmatprep.subr.mxu0 0.0
      %905 = vmatpush1.msra.mxu0 0.0
      %906 = vmatprep.subr.mxu0 0.0
      %907 = vmatpush1.msra.mxu0 0.0
      %908 = vmatprep.subr.mxu0 0.0
      %909 = vmatpush1.msra.mxu0 0.0
      %910 = vmatprep.subr.mxu0 0.0
      %911 = vmatpush1.msra.mxu0 0.0
      %912 = vmatprep.subr.mxu0 0.0
      %913 = vmatpush1.msra.mxu0 0.0
      %914 = vmatprep.subr.mxu0 0.0
      %915 = vmatpush1.msra.mxu0 0.0
      %916 = vmatprep.subr.mxu0 0.0
      %917 = vmatpush1.msra.mxu0 0.0
      %918 = vmatprep.subr.mxu0 0.0
      %919 = vmatpush1.msra.mxu0 0.0
      %920 = vmatprep.subr.mxu0 0.0
      %921 = vmatpush1.msra.mxu0 0.0
      %922 = vmatprep.subr.mxu0 0.0
      %923 = vmatpush1.msra.mxu0 0.0
      %924 = vmatprep.subr.mxu0 0.0
      %925 = vmatpush1.msra.mxu0 0.0
      %926 = vmatprep.subr.mxu0 0.0
      %927 = vmatpush1.msra.mxu0 0.0
      %928 = vmatprep.subr.mxu0 0.0
      %929 = vmatpush1.msra.mxu0 0.0
      %930 = vmatprep.subr.mxu0 0.0
      %931 = vmatpush1.msra.mxu0 0.0
      %932 = vmatprep.subr.mxu0 0.0
      %933 = vmatpush1.msra.mxu0 0.0
      %934 = vmatprep.subr.mxu0 0.0
      %935 = vmatpush1.msra.mxu0 0.0
      %936 = vmatprep.subr.mxu0 0.0
      %937 = vmatpush1.msra.mxu0 0.0
      %938 = vmatprep.subr.mxu0 0.0
      %939 = vmatpush1.msra.mxu0 0.0
      %940 = vmatprep.subr.mxu0 0.0
      %941 = vmatpush1.msra.mxu0 0.0
      %942 = vmatprep.subr.mxu0 0.0
      %943 = vmatpush1.msra.mxu0 0.0
      %944 = vmatprep.subr.mxu0 0.0
      %945 = vmatpush1.msra.mxu0 0.0
      %946 = vmatprep.subr.mxu0 0.0
      %947 = vmatpush1.msra.mxu0 0.0
      %948 = vmatprep.mubr.f32.mxu0 0.0
      %949 = vmatmul.mubr.f32.gmra.mrb[0].mxu0 %v476
      %v950 = vpop.f32.mrb[0].mxu0
      %v951 = vadd.f32 %v471, %v950
      %v952 = vpop.f32.mrb[0].mxu0
      %953 = vdwg.mxu0
      %vm954 = vcmp.gt.f32.partialorder %v951, 0.0
      %v955 = vmin.f32 %v951, 0.0
      %v956 = vmul.f32 %v955, 1.442695
      %v957 = vpow.pop %v956
      %v958 = vsub.f32 %v957, 1.0
      %v959 = vsel %vm954, %v951, %v958
      %v961 = vsel %vm554, %v959, 0
      %963 = vmatprep.subr.mxu0 0.0
      %964 = vmatpush1.msra.mxu0 %v218
      %965 = vmatprep.subr.mxu0 0.0
      %966 = vmatpush1.msra.mxu0 %v219
      %967 = vmatprep.subr.mxu0 0.0
      %968 = vmatpush1.msra.mxu0 %v220
      %969 = vmatprep.subr.mxu0 0.0
      %970 = vmatpush1.msra.mxu0 %v221
      %971 = vmatprep.subr.mxu0 0.0
      %972 = vmatpush1.msra.mxu0 0.0
      %973 = vmatprep.subr.mxu0 0.0
      %974 = vmatpush1.msra.mxu0 0.0
      %975 = vmatprep.subr.mxu0 0.0
      %976 = vmatpush1.msra.mxu0 0.0
      %977 = vmatprep.subr.mxu0 0.0
      %978 = vmatpush1.msra.mxu0 0.0
      %979 = vmatprep.subr.mxu0 0.0
      %980 = vmatpush1.msra.mxu0 0.0
      %981 = vmatprep.subr.mxu0 0.0
      %982 = vmatpush1.msra.mxu0 0.0
      %983 = vmatprep.subr.mxu0 0.0
      %984 = vmatpush1.msra.mxu0 0.0
      %985 = vmatprep.subr.mxu0 0.0
      %986 = vmatpush1.msra.mxu0 0.0
      %987 = vmatprep.subr.mxu0 0.0
      %988 = vmatpush1.msra.mxu0 0.0
      %989 = vmatprep.subr.mxu0 0.0
      %990 = vmatpush1.msra.mxu0 0.0
      %991 = vmatprep.subr.mxu0 0.0
      %992 = vmatpush1.msra.mxu0 0.0
      %993 = vmatprep.subr.mxu0 0.0
      %994 = vmatpush1.msra.mxu0 0.0
      %995 = vmatprep.subr.mxu0 0.0
      %996 = vmatpush1.msra.mxu0 0.0
      %997 = vmatprep.subr.mxu0 0.0
      %998 = vmatpush1.msra.mxu0 0.0
      %999 = vmatprep.subr.mxu0 0.0
      %1000 = vmatpush1.msra.mxu0 0.0
      %1001 = vmatprep.subr.mxu0 0.0
      %1002 = vmatpush1.msra.mxu0 0.0
      %1003 = vmatprep.subr.mxu0 0.0
      %1004 = vmatpush1.msra.mxu0 0.0
      %1005 = vmatprep.subr.mxu0 0.0
      %1006 = vmatpush1.msra.mxu0 0.0
      %1007 = vmatprep.subr.mxu0 0.0
      %1008 = vmatpush1.msra.mxu0 0.0
      %1009 = vmatprep.subr.mxu0 0.0
      %1010 = vmatpush1.msra.mxu0 0.0
      %1011 = vmatprep.subr.mxu0 0.0
      %1012 = vmatpush1.msra.mxu0 0.0
      %1013 = vmatprep.subr.mxu0 0.0
      %1014 = vmatpush1.msra.mxu0 0.0
      %1015 = vmatprep.subr.mxu0 0.0
      %1016 = vmatpush1.msra.mxu0 0.0
      %1017 = vmatprep.subr.mxu0 0.0
      %1018 = vmatpush1.msra.mxu0 0.0
      %1019 = vmatprep.subr.mxu0 0.0
      %1020 = vmatpush1.msra.mxu0 0.0
      %1021 = vmatprep.subr.mxu0 0.0
      %1022 = vmatpush1.msra.mxu0 0.0
      %1023 = vmatprep.subr.mxu0 0.0
      %1024 = vmatpush1.msra.mxu0 0.0
      %1025 = vmatprep.subr.mxu0 0.0
      %1026 = vmatpush1.msra.mxu0 0.0
      %1027 = vmatprep.mubr.f32.mxu0 0.0
      %1028 = vmatmul.mubr.f32.gmra.mrb[0].mxu0 %v961
      %v1029 = vpop.f32.mrb[0].mxu0
      %v1030 = vadd.f32 0.0, %v1029
      %v1031 = vpop.f32.mrb[0].mxu0
      %1032 = vdwg.mxu0
      %v1034 = vrot.slane %v1030, 1
      %1035 = vrot.lane.b32.xlu0 %v1034, 4
      %v1036 = vpop.permute.xlu0 %1035
      %v1038 = vrot.slane %v1030, 2
      %1039 = vrot.lane.b32.xlu0 %v1038, 8
      %v1040 = vpop.permute.xlu0 %1039
      %v1042 = vrot.slane %v1030, 3
      %1043 = vrot.lane.b32.xlu0 %v1042, 12
      %v1044 = vpop.permute.xlu0 %1043
      %v1046 = vrot.slane %v1030, 4
      %1047 = vrot.lane.b32.xlu0 %v1046, 16
      %v1048 = vpop.permute.xlu0 %1047
      %v1050 = vrot.slane %v1030, 5
      %1051 = vrot.lane.b32.xlu0 %v1050, 20
      %v1052 = vpop.permute.xlu0 %1051
      %v1054 = vrot.slane %v1030, 6
      %1055 = vrot.lane.b32.xlu0 %v1054, 24
      %v1056 = vpop.permute.xlu0 %1055
      %v1058 = vrot.slane %v1030, 7
      %1059 = vrot.lane.b32.xlu0 %v1058, 28
      %v1060 = vpop.permute.xlu0 %1059
      %v1062 = vsel %vm657, %v1030, %v1036
      %v1063 = vsel %vm475, %v1062, %v1040
      %v1064 = vsel %vm660, %v1063, %v1044
      %v1065 = vsel %vm662, %v1064, %v1048
      %v1066 = vsel %vm664, %v1065, %v1052
      %v1067 = vsel %vm666, %v1066, %v1056
      %v1068 = vsel %vm668, %v1067, %v1060
      %v1070 = vrot.slane %v1068, 7
      %vm1072 = vcmask 1040384
      %v1073 = vsel %vm1072, %v669, %v1070
      %1078 = vrot.lane.b32.xlu0 %v218, 124
      %v1079 = vpop.permute.xlu0 %1078
      %1080 = vrot.lane.b32.xlu0 %v219, 124
      %v1081 = vpop.permute.xlu0 %1080
      %1082 = vrot.lane.b32.xlu0 %v220, 124
      %v1083 = vpop.permute.xlu0 %1082
      %1084 = vrot.lane.b32.xlu0 %v221, 124
      %v1085 = vpop.permute.xlu0 %1084
      %v1091 = vsel %vm554, %v1073, 0
      %1093 = vmatprep.subr.mxu0 0.0
      %1094 = vmatpush1.msra.mxu0 %v1079
      %1095 = vmatprep.subr.mxu0 0.0
      %1096 = vmatpush1.msra.mxu0 %v1081
      %1097 = vmatprep.subr.mxu0 0.0
      %1098 = vmatpush1.msra.mxu0 %v1083
      %1099 = vmatprep.subr.mxu0 0.0
      %1100 = vmatpush1.msra.mxu0 %v1085
      %1101 = vmatprep.subr.mxu0 0.0
      %1102 = vmatpush1.msra.mxu0 0.0
      %1103 = vmatprep.subr.mxu0 0.0
      %1104 = vmatpush1.msra.mxu0 0.0
      %1105 = vmatprep.subr.mxu0 0.0
      %1106 = vmatpush1.msra.mxu0 0.0
      %1107 = vmatprep.subr.mxu0 0.0
      %1108 = vmatpush1.msra.mxu0 0.0
      %1109 = vmatprep.subr.mxu0 0.0
      %1110 = vmatpush1.msra.mxu0 0.0
      %1111 = vmatprep.subr.mxu0 0.0
      %1112 = vmatpush1.msra.mxu0 0.0
      %1113 = vmatprep.subr.mxu0 0.0
      %1114 = vmatpush1.msra.mxu0 0.0
      %1115 = vmatprep.subr.mxu0 0.0
      %1116 = vmatpush1.msra.mxu0 0.0
      %1117 = vmatprep.subr.mxu0 0.0
      %1118 = vmatpush1.msra.mxu0 0.0
      %1119 = vmatprep.subr.mxu0 0.0
      %1120 = vmatpush1.msra.mxu0 0.0
      %1121 = vmatprep.subr.mxu0 0.0
      %1122 = vmatpush1.msra.mxu0 0.0
      %1123 = vmatprep.subr.mxu0 0.0
      %1124 = vmatpush1.msra.mxu0 0.0
      %1125 = vmatprep.subr.mxu0 0.0
      %1126 = vmatpush1.msra.mxu0 0.0
      %1127 = vmatprep.subr.mxu0 0.0
      %1128 = vmatpush1.msra.mxu0 0.0
      %1129 = vmatprep.subr.mxu0 0.0
      %1130 = vmatpush1.msra.mxu0 0.0
      %1131 = vmatprep.subr.mxu0 0.0
      %1132 = vmatpush1.msra.mxu0 0.0
      %1133 = vmatprep.subr.mxu0 0.0
      %1134 = vmatpush1.msra.mxu0 0.0
      %1135 = vmatprep.subr.mxu0 0.0
      %1136 = vmatpush1.msra.mxu0 0.0
      %1137 = vmatprep.subr.mxu0 0.0
      %1138 = vmatpush1.msra.mxu0 0.0
      %1139 = vmatprep.subr.mxu0 0.0
      %1140 = vmatpush1.msra.mxu0 0.0
      %1141 = vmatprep.subr.mxu0 0.0
      %1142 = vmatpush1.msra.mxu0 0.0
      %1143 = vmatprep.subr.mxu0 0.0
      %1144 = vmatpush1.msra.mxu0 0.0
      %1145 = vmatprep.subr.mxu0 0.0
      %1146 = vmatpush1.msra.mxu0 0.0
      %1147 = vmatprep.subr.mxu0 0.0
      %1148 = vmatpush1.msra.mxu0 0.0
      %1149 = vmatprep.subr.mxu0 0.0
      %1150 = vmatpush1.msra.mxu0 0.0
      %1151 = vmatprep.subr.mxu0 0.0
      %1152 = vmatpush1.msra.mxu0 0.0
      %1153 = vmatprep.subr.mxu0 0.0
      %1154 = vmatpush1.msra.mxu0 0.0
      %1155 = vmatprep.subr.mxu0 0.0
      %1156 = vmatpush1.msra.mxu0 0.0
      %1157 = vmatprep.mubr.f32.mxu0 0.0
      %1158 = vmatmul.mubr.f32.gmra.mrb[0].mxu0 %v1091
      %v1159 = vpop.f32.mrb[0].mxu0
      %v1160 = vadd.f32 0.0, %v1159
      %v1161 = vpop.f32.mrb[0].mxu0
      %1162 = vdwg.mxu0
      %vm1163 = vcmask 254976
      %1164 = vst.msk [vmem:[%s200] sm:$0x3] %vm1163, %v1160
      %p1165 = scmp.lt.s32.totalorder %s15, 1
      %s1166 = scalar_select %p1165, %s15, 1
      %s1167 = smul.addr %s1166, 2
      %s1168 = scalar_lea.vmem %s4, %s1167
      // Predicated region
      $region37: #{eegnet_forward.1} parent=35 // pred_check
        %p1169 = pneg %p122
      $region38: #{eegnet_forward.1} parent=35 // pred_check_branch
        %1171 = sbr.rel (%p1169) target = $region40
      $region39: #{eegnet_forward.1} parent=35 // pred_region
        _
      $region40: #{eegnet_forward.1} parent=35 // pred_fallthru
        _
    $region36: #{eegnet_forward.1} parent=5 // pred_fallthru
      _
    %p1172 = scmp.le.s32.totalorder 2, %s10
    // Predicated region
    $region41: #{eegnet_forward.1} parent=5 // pred_check
      %p1173 = pneg %p1172
    $region42: #{eegnet_forward.1} parent=5 // pred_check_branch
      %1175 = sbr.rel (%p1173) target = $region44
    $region43: #{eegnet_forward.1} parent=5 // pred_region
      %s1176 = ssub.s32 %s10, 2
      // Predicated region
      $region45: #{eegnet_forward.1} parent=43 // pred_check
        %p1177 = pneg %p128
      $region46: #{eegnet_forward.1} parent=43 // pred_check_branch
        %1179 = sbr.rel (%p1177) target = $region48
      $region47: #{eegnet_forward.1} parent=43 // pred_region
        %p1180 = scmp.lt.s32.totalorder %s16, 1
        %s1181 = scalar_select %p1180, %s16, 1
        %s1182 = smul.addr %s1181, 2
        %s1183 = scalar_lea.vmem %s4, %s1182
      $region48: #{eegnet_forward.1} parent=43 // pred_fallthru
        _
    $region44: #{eegnet_forward.1} parent=5 // pred_fallthru
      _
  $region6: #{eegnet_forward.1} parent=0 // loop_footer
    %s14 = sadd.s32 1, %s10
  $region7: #{eegnet_forward.1} parent=0 // loop_footer_branch
    %9 = sbr.rel target = $region3
  $region8: #{eegnet_forward.1} parent=0 // loop_exit
    _

</llo_original>
